<compile_context>
chip_gen: v6e
topology: v6e:2x2x1
jax: 0.10.0
libtpu: 0.0.40
codegen_flags: <defaults>
</compile_context>

<pallas_src>
import math

import jax
import jax.numpy as jnp
from jax.experimental import pallas as pl
from jax.experimental.pallas import tpu as pltpu


_INV_SQRT2 = 1.0 / math.sqrt(2.0)


def _round_up(x, m):
    return ((x + m - 1) // m) * m


# ---------------------------------------------------------------------------
# Kernel:  h = q@Wq^T + k@Wk^T + bk ;  g = GELU(h) ;  out = g@Wo^T + bo
# (two K=E_p MXU passes instead of one K=2*E_p pass over a concatenated copy)
# ---------------------------------------------------------------------------
def _fake_cross_attn_kernel(q_ref, k_ref, wq_ref, wk_ref, bk_ref, wo_ref,
                            bo_ref, o_ref):
    # astype to the weight dtype is a no-op for f32 weights; for bf16 weights
    # it keeps both MXU operands bf16 (native rate) with an f32 accumulator.
    h = jnp.dot(q_ref[...].astype(wq_ref.dtype), wq_ref[...],
                preferred_element_type=jnp.float32)
    h = h + jnp.dot(k_ref[...].astype(wk_ref.dtype), wk_ref[...],
                    preferred_element_type=jnp.float32)
    h = h + bk_ref[...].astype(jnp.float32)

    # Exact GELU (nn.GELU() default): 0.5 * x * (1 + erf(x / sqrt(2))), in f32.
    g = 0.5 * h * (1.0 + jax.lax.erf(h * _INV_SQRT2))

    out = jnp.dot(g.astype(wo_ref.dtype), wo_ref[...],
                  preferred_element_type=jnp.float32)
    out = out + bo_ref[...].astype(jnp.float32)
    o_ref[...] = out.astype(o_ref.dtype)


# ---------------------------------------------------------------------------
# One-time parameter preparation (hoisted out of the per-call path):
# transpose PyTorch (out,in) weights to (in,out) and pad the embedding dim to
# a multiple of 128 lanes. Optionally cast weights to a compute dtype (bf16).
# ---------------------------------------------------------------------------
def prepare_fake_cross_attn_params(wq, wk, bk, wo, bo, *, lane_multiple=128,
                                   dtype=None):
    E = wq.shape[0]
    kdim = wk.shape[1]
    # forward() asserts query.size() == key.size(), so kdim must equal E.
    assert kdim == E
    E_p = _round_up(E, lane_multiple)

    def pad2(w):
        return jnp.pad(w, ((0, E_p - w.shape[0]), (0, E_p - w.shape[1])))

    wq_t = pad2(wq.T)                                   # (E_p, E_p)  q_proj (no bias)
    wk_t = pad2(wk.T)                                   # (E_p, E_p)  k_proj
    wo_t = pad2(wo.T)                                   # (E_p, E_p)  out_proj
    bk_p = jnp.pad(bk, (0, E_p - E)).reshape(1, E_p)
    bo_p = jnp.pad(bo, (0, E_p - E)).reshape(1, E_p)

    if dtype is not None:
        wq_t, wk_t, wo_t = (x.astype(dtype) for x in (wq_t, wk_t, wo_t))
        bk_p, bo_p = bk_p.astype(dtype), bo_p.astype(dtype)

    return {"wq": wq_t, "wk": wk_t, "bk": bk_p, "wo": wo_t, "bo": bo_p,
            "embed_dim": E, "padded_dim": E_p}


# ---------------------------------------------------------------------------
# Wrapper
# ---------------------------------------------------------------------------
def fake_cross_attn_pallas(query, key, params, value=None, *, tile_n=512):
    """query, key: (B, S, E). params from prepare_fake_cross_attn_params."""
    del value  # unused by the original module as well
    assert query.shape == key.shape, "assert query.size() == key.size()"
    B, S, E = query.shape
    assert E == params["embed_dim"]
    E_p = params["padded_dim"]
    N = B * S

    wq_t, wk_t, bk2, wo_t, bo2 = (params["wq"], params["wk"], params["bk"],
                                  params["wo"], params["bo"])
    in_itemsize = jnp.dtype(query.dtype).itemsize
    w_itemsize = jnp.dtype(wq_t.dtype).itemsize

    # Row tile: sublane-aligned, capped so the grid has >=2 steps when N allows
    # (so ("parallel",) can shard rows across v7x's 2 TensorCores).
    sublane = max(8, 32 // max(in_itemsize, 1))
    tile_n = _round_up(max(int(tile_n), sublane), sublane)
    tile_n = min(tile_n, _round_up(N, sublane))
    if N > 2 * sublane:
        tile_n = min(tile_n, _round_up(pl.cdiv(N, 2), sublane))
    tile_n = max(tile_n, sublane)
    grid = (pl.cdiv(N, tile_n),)

    # Only pad lanes when E is not already a multiple of 128; never pad rows
    # (Pallas clips the ragged last row block of inputs and output).
    q2 = query.reshape(N, E)
    k2 = key.reshape(N, E)
    if E_p != E:
        q2 = jnp.pad(q2, ((0, 0), (0, E_p - E)))
        k2 = jnp.pad(k2, ((0, 0), (0, E_p - E)))

    # Advisory cost estimate for the XLA scheduler.
    flops = 6 * N * E_p * E_p                       # 3 matmuls of (N,E_p)x(E_p,E_p)
    bytes_accessed = (3 * N * E_p * in_itemsize     # q, k in + out
                      + 3 * E_p * E_p * w_itemsize  # wq, wk, wo
                      + 2 * E_p * w_itemsize)       # biases
    cost = pl.CostEstimate(flops=int(flops),
                           transcendentals=int(N * E_p),
                           bytes_accessed=int(bytes_accessed))

    tile_bytes = tile_n * E_p * in_itemsize
    weight_bytes = 3 * E_p * E_p * w_itemsize + 2 * E_p * w_itemsize
    interm_bytes = 5 * tile_n * E_p * 4             # in-kernel f32 h/g/out temps

    try:
        vmem_cap = int(pltpu.get_tpu_info().vmem_capacity_bytes)
    except Exception:
        vmem_cap = 64 << 20                         # conservative (v7x per-TC)
    vmem_cap_budget = max(vmem_cap - (8 << 20), 16 << 20)

    def _run(single_buffer_weights):
        wkw = ({"pipeline_mode": pl.Buffered(1)} if single_buffer_weights
               else {})
        weight_bufs = 1 if single_buffer_weights else 2
        est = (2 * 2 * tile_bytes           # q, k double-buffered tiles
               + 2 * tile_bytes             # out double-buffered tile
               + weight_bufs * weight_bytes
               + interm_bytes)
        vmem_limit = int(min(max(int(1.5 * est) + (4 << 20), 32 << 20),
                             vmem_cap_budget))
        return pl.pallas_call(
            _fake_cross_attn_kernel,
            out_shape=jax.ShapeDtypeStruct((N, E_p), query.dtype),
            grid_spec=pltpu.PrefetchScalarGridSpec(
                num_scalar_prefetch=0,
                grid=grid,
                in_specs=[
                    pl.BlockSpec((tile_n, E_p), lambda i: (i, 0)),        # q rows
                    pl.BlockSpec((tile_n, E_p), lambda i: (i, 0)),        # k rows
                    pl.BlockSpec((E_p, E_p), lambda i: (0, 0), **wkw),    # Wq^T
                    pl.BlockSpec((E_p, E_p), lambda i: (0, 0), **wkw),    # Wk^T
                    pl.BlockSpec((1, E_p), lambda i: (0, 0), **wkw),      # bk
                    pl.BlockSpec((E_p, E_p), lambda i: (0, 0), **wkw),    # Wo^T
                    pl.BlockSpec((1, E_p), lambda i: (0, 0), **wkw),      # bo
                ],
                out_specs=pl.BlockSpec((tile_n, E_p), lambda i: (i, 0)),
            ),
            compiler_params=pltpu.CompilerParams(
                dimension_semantics=("parallel",),
                vmem_limit_bytes=vmem_limit),
            cost_estimate=cost,
        )(q2, k2, wq_t, wk_t, bk2, wo_t, bo2)

    try:
        out2 = _run(True)       # single-buffered grid-invariant weights
    except Exception:
        out2 = _run(False)      # portable fallback (default double-buffering)

    out = out2[:, :E] if E_p != E else out2
    return out.reshape(B, S, E), None


# ---------------------------------------------------------------------------
# Deterministic parameter init (mirrors the PyTorch __init__)
# ---------------------------------------------------------------------------
def _xavier_uniform(key, out_dim, in_dim, gain=1.0, dtype=jnp.float32):
    bound = gain * math.sqrt(6.0 / (in_dim + out_dim))
    return jax.random.uniform(key, (out_dim, in_dim), dtype,
                              minval=-bound, maxval=bound)


def init_fake_cross_attn_params(key, embed_dim, kdim, bias=True,
                                dtype=jnp.float32):
    k1, k2, k3, k4 = jax.random.split(key, 4)
    wq = _xavier_uniform(k1, embed_dim, embed_dim, gain=1.0 / math.sqrt(2.0), dtype=dtype)
    wk = _xavier_uniform(k2, embed_dim, kdim,      gain=1.0 / math.sqrt(2.0), dtype=dtype)
    wo = _xavier_uniform(k3, embed_dim, embed_dim, gain=1.0,                  dtype=dtype)
    if bias:
        bnd = 1.0 / math.sqrt(kdim)
        bk = jax.random.uniform(k4, (embed_dim,), dtype, minval=-bnd, maxval=bnd)
    else:
        bk = jnp.zeros((embed_dim,), dtype)
    bo = jnp.zeros((embed_dim,), dtype)   # nn.init.constant_(out_proj.bias, 0.0)
    return wq, wk, bk, wo, bo


# ---------------------------------------------------------------------------
# Pure-JAX reference for correctness check
# ---------------------------------------------------------------------------
def fake_cross_attn_ref(query, key, wq, wk, bk, wo, bo):
    q = query @ wq.T
    k = key @ wk.T + bk
    h = q + k
    g = 0.5 * h * (1.0 + jax.lax.erf(h / math.sqrt(2.0)))
    return g @ wo.T + bo


if __name__ == "__main__":
    # Small shapes. forward asserts query.size() == key.size(), which requires
    # kdim == embed_dim for k_proj to type-check.
    configs = [
        (2, 9, 128),   # lane-aligned E (no pad path), ragged last row tile, 2 grid steps
        (2, 8, 32),    # tiny E -> lane padding path
    ]
    root = jax.random.PRNGKey(0)
    for idx, (B, S, E) in enumerate(configs):
        kp, kq, kk = jax.random.split(jax.random.fold_in(root, idx), 3)
        wq, wk, bk, wo, bo = init_fake_cross_attn_params(kp, E, E, bias=True)
        params = prepare_fake_cross_attn_params(wq, wk, bk, wo, bo)

        query = jax.random.normal(kq, (B, S, E), jnp.float32)
        key = jax.random.normal(kk, (B, S, E), jnp.float32)

        out, attn = fake_cross_attn_pallas(query, key, params, value=None)
        out = jax.block_until_ready(out)
        assert attn is None
        assert out.shape == (B, S, E)

        ref = fake_cross_attn_ref(query, key, wq, wk, bk, wo, bo)
        max_err = float(jnp.max(jnp.abs(out - ref)))
        assert jnp.allclose(out, ref, atol=1e-4, rtol=1e-4), max_err

    print("KERNEL_OK")
</pallas_src>

<mosaic_0001>
module attributes {stable_mosaic.version = 11 : i64} {
  func.func @_fake_cross_attn_kernel(%arg0: i32, %arg1: memref<16x128xf32, #tpu.memory_space<vmem>>, %arg2: memref<16x128xf32, #tpu.memory_space<vmem>>, %arg3: memref<128x128xf32, #tpu.memory_space<vmem>>, %arg4: memref<128x128xf32, #tpu.memory_space<vmem>>, %arg5: memref<1x128xf32, #tpu.memory_space<vmem>>, %arg6: memref<128x128xf32, #tpu.memory_space<vmem>>, %arg7: memref<1x128xf32, #tpu.memory_space<vmem>>, %arg8: memref<16x128xf32, #tpu.memory_space<vmem>>) attributes {dimension_semantics = [#tpu.dimension_semantics<parallel>], iteration_bounds = array<i64: 2>, scalar_prefetch = 0 : i64, scratch_operands = 0 : i64, tpu.core_type = #tpu.core_type<tc>, window_params = [{transform_indices = @transform_0, window_bounds = array<i64: 16, 128>}, {transform_indices = @transform_1, window_bounds = array<i64: 16, 128>}, {pipeline_mode = #tpu.pipeline_mode<synchronous>, transform_indices = @transform_2, window_bounds = array<i64: 128, 128>}, {pipeline_mode = #tpu.pipeline_mode<synchronous>, transform_indices = @transform_3, window_bounds = array<i64: 128, 128>}, {pipeline_mode = #tpu.pipeline_mode<synchronous>, transform_indices = @transform_4, window_bounds = array<i64: 1, 128>}, {pipeline_mode = #tpu.pipeline_mode<synchronous>, transform_indices = @transform_5, window_bounds = array<i64: 128, 128>}, {pipeline_mode = #tpu.pipeline_mode<synchronous>, transform_indices = @transform_6, window_bounds = array<i64: 1, 128>}, {transform_indices = @transform_7, window_bounds = array<i64: 16, 128>}]} {
    %c0 = arith.constant 0 : index
    %c0_0 = arith.constant 0 : index
    %0 = vector.load %arg1[%c0, %c0_0] : memref<16x128xf32, #tpu.memory_space<vmem>>, vector<16x128xf32>
    %c0_1 = arith.constant 0 : index
    %c0_2 = arith.constant 0 : index
    %1 = vector.load %arg3[%c0_1, %c0_2] : memref<128x128xf32, #tpu.memory_space<vmem>>, vector<128x128xf32>
    %cst = arith.constant dense<0.000000e+00> : vector<16x128xf32>
    %2 = tpu.matmul %0, %1, %cst {dimension_numbers = #tpu.dot_dimension_numbers<[1], [0], [0], [1], [0, 0, 1, 1], [], []>} : vector<16x128xf32>, vector<128x128xf32>, vector<16x128xf32> -> vector<16x128xf32>
    %c0_3 = arith.constant 0 : index
    %c0_4 = arith.constant 0 : index
    %3 = vector.load %arg2[%c0_3, %c0_4] : memref<16x128xf32, #tpu.memory_space<vmem>>, vector<16x128xf32>
    %c0_5 = arith.constant 0 : index
    %c0_6 = arith.constant 0 : index
    %4 = vector.load %arg4[%c0_5, %c0_6] : memref<128x128xf32, #tpu.memory_space<vmem>>, vector<128x128xf32>
    %cst_7 = arith.constant dense<0.000000e+00> : vector<16x128xf32>
    %5 = tpu.matmul %3, %4, %cst_7 {dimension_numbers = #tpu.dot_dimension_numbers<[1], [0], [0], [1], [0, 0, 1, 1], [], []>} : vector<16x128xf32>, vector<128x128xf32>, vector<16x128xf32> -> vector<16x128xf32>
    %6 = arith.addf %2, %5 : vector<16x128xf32>
    %c0_8 = arith.constant 0 : index
    %c0_9 = arith.constant 0 : index
    %7 = vector.load %arg5[%c0_8, %c0_9] : memref<1x128xf32, #tpu.memory_space<vmem>>, vector<1x128xf32>
    %8 = vector.broadcast %7 : vector<1x128xf32> to vector<16x128xf32>
    %9 = arith.addf %6, %8 : vector<16x128xf32>
    %cst_10 = arith.constant 5.000000e-01 : f32
    %10 = vector.broadcast %cst_10 : f32 to vector<16x128xf32>
    %11 = arith.mulf %10, %9 : vector<16x128xf32>
    %cst_11 = arith.constant 0.707106769 : f32
    %12 = vector.broadcast %cst_11 : f32 to vector<16x128xf32>
    %13 = arith.mulf %9, %12 : vector<16x128xf32>
    %14 = math.erf %13 : vector<16x128xf32>
    %cst_12 = arith.constant 1.000000e+00 : f32
    %15 = vector.broadcast %cst_12 : f32 to vector<16x128xf32>
    %16 = arith.addf %15, %14 : vector<16x128xf32>
    %17 = arith.mulf %11, %16 : vector<16x128xf32>
    %c0_13 = arith.constant 0 : index
    %c0_14 = arith.constant 0 : index
    %18 = vector.load %arg6[%c0_13, %c0_14] : memref<128x128xf32, #tpu.memory_space<vmem>>, vector<128x128xf32>
    %cst_15 = arith.constant dense<0.000000e+00> : vector<16x128xf32>
    %19 = tpu.matmul %17, %18, %cst_15 {dimension_numbers = #tpu.dot_dimension_numbers<[1], [0], [0], [1], [0, 0, 1, 1], [], []>} : vector<16x128xf32>, vector<128x128xf32>, vector<16x128xf32> -> vector<16x128xf32>
    %c0_16 = arith.constant 0 : index
    %c0_17 = arith.constant 0 : index
    %20 = vector.load %arg7[%c0_16, %c0_17] : memref<1x128xf32, #tpu.memory_space<vmem>>, vector<1x128xf32>
    %21 = vector.broadcast %20 : vector<1x128xf32> to vector<16x128xf32>
    %22 = arith.addf %19, %21 : vector<16x128xf32>
    %c0_18 = arith.constant 0 : index
    %c0_19 = arith.constant 0 : index
    %23 = vector.load %arg8[%c0_18, %c0_19] : memref<16x128xf32, #tpu.memory_space<vmem>>, vector<16x128xf32>
    tpu.vector_store %arg8[%c0_18, %c0_19], %22 {strides = array<i32>} : memref<16x128xf32, #tpu.memory_space<vmem>>, vector<16x128xf32>,
    return
  }
  func.func @transform_0(%arg0: i32) -> (i32, i32) {
    %c0_i32 = arith.constant 0 : i32
    %c0_i32_0 = arith.constant 0 : i32
    return %arg0, %c0_i32 : i32, i32
  }
  func.func @transform_1(%arg0: i32) -> (i32, i32) {
    %c0_i32 = arith.constant 0 : i32
    %c0_i32_0 = arith.constant 0 : i32
    return %arg0, %c0_i32 : i32, i32
  }
  func.func @transform_2(%arg0: i32) -> (i32, i32) {
    %c0_i32 = arith.constant 0 : i32
    %c0_i32_0 = arith.constant 0 : i32
    %c0_i32_1 = arith.constant 0 : i32
    return %c0_i32, %c0_i32_0 : i32, i32
  }
  func.func @transform_3(%arg0: i32) -> (i32, i32) {
    %c0_i32 = arith.constant 0 : i32
    %c0_i32_0 = arith.constant 0 : i32
    %c0_i32_1 = arith.constant 0 : i32
    return %c0_i32, %c0_i32_0 : i32, i32
  }
  func.func @transform_4(%arg0: i32) -> (i32, i32) {
    %c0_i32 = arith.constant 0 : i32
    %c0_i32_0 = arith.constant 0 : i32
    %c0_i32_1 = arith.constant 0 : i32
    return %c0_i32, %c0_i32_0 : i32, i32
  }
  func.func @transform_5(%arg0: i32) -> (i32, i32) {
    %c0_i32 = arith.constant 0 : i32
    %c0_i32_0 = arith.constant 0 : i32
    %c0_i32_1 = arith.constant 0 : i32
    return %c0_i32, %c0_i32_0 : i32, i32
  }
  func.func @transform_6(%arg0: i32) -> (i32, i32) {
    %c0_i32 = arith.constant 0 : i32
    %c0_i32_0 = arith.constant 0 : i32
    %c0_i32_1 = arith.constant 0 : i32
    return %c0_i32, %c0_i32_0 : i32, i32
  }
  func.func @transform_7(%arg0: i32) -> (i32, i32) {
    %c0_i32 = arith.constant 0 : i32
    %c0_i32_0 = arith.constant 0 : i32
    return %arg0, %c0_i32 : i32, i32
  }
}

module attributes {stable_mosaic.version = 11 : i64} {
  func.func @_fake_cross_attn_kernel(%arg0: i32, %arg1: memref<16x128xf32, #tpu.memory_space<vmem>>, %arg2: memref<16x128xf32, #tpu.memory_space<vmem>>, %arg3: memref<128x128xf32, #tpu.memory_space<vmem>>, %arg4: memref<128x128xf32, #tpu.memory_space<vmem>>, %arg5: memref<1x128xf32, #tpu.memory_space<vmem>>, %arg6: memref<128x128xf32, #tpu.memory_space<vmem>>, %arg7: memref<1x128xf32, #tpu.memory_space<vmem>>, %arg8: memref<16x128xf32, #tpu.memory_space<vmem>>) attributes {dimension_semantics = [#tpu.dimension_semantics<parallel>], iteration_bounds = array<i64: 2>, scalar_prefetch = 0 : i64, scratch_operands = 0 : i64, tpu.core_type = #tpu.core_type<tc>, window_params = [{transform_indices = @transform_0, window_bounds = array<i64: 16, 128>}, {transform_indices = @transform_1, window_bounds = array<i64: 16, 128>}, {pipeline_mode = #tpu.pipeline_mode<synchronous>, transform_indices = @transform_2, window_bounds = array<i64: 128, 128>}, {pipeline_mode = #tpu.pipeline_mode<synchronous>, transform_indices = @transform_3, window_bounds = array<i64: 128, 128>}, {pipeline_mode = #tpu.pipeline_mode<synchronous>, transform_indices = @transform_4, window_bounds = array<i64: 1, 128>}, {pipeline_mode = #tpu.pipeline_mode<synchronous>, transform_indices = @transform_5, window_bounds = array<i64: 128, 128>}, {pipeline_mode = #tpu.pipeline_mode<synchronous>, transform_indices = @transform_6, window_bounds = array<i64: 1, 128>}, {transform_indices = @transform_7, window_bounds = array<i64: 16, 128>}]} {
    %c0 = arith.constant 0 : index
    %c0_0 = arith.constant 0 : index
    %0 = vector.load %arg1[%c0, %c0_0] : memref<16x128xf32, #tpu.memory_space<vmem>>, vector<16x128xf32>
    %c0_1 = arith.constant 0 : index
    %c0_2 = arith.constant 0 : index
    %1 = vector.load %arg3[%c0_1, %c0_2] : memref<128x128xf32, #tpu.memory_space<vmem>>, vector<128x128xf32>
    %cst = arith.constant dense<0.000000e+00> : vector<16x128xf32>
    %2 = tpu.matmul %0, %1, %cst {dimension_numbers = #tpu.dot_dimension_numbers<[1], [0], [0], [1], [0, 0, 1, 1], [], []>} : vector<16x128xf32>, vector<128x128xf32>, vector<16x128xf32> -> vector<16x128xf32>
    %c0_3 = arith.constant 0 : index
    %c0_4 = arith.constant 0 : index
    %3 = vector.load %arg2[%c0_3, %c0_4] : memref<16x128xf32, #tpu.memory_space<vmem>>, vector<16x128xf32>
    %c0_5 = arith.constant 0 : index
    %c0_6 = arith.constant 0 : index
    %4 = vector.load %arg4[%c0_5, %c0_6] : memref<128x128xf32, #tpu.memory_space<vmem>>, vector<128x128xf32>
    %cst_7 = arith.constant dense<0.000000e+00> : vector<16x128xf32>
    %5 = tpu.matmul %3, %4, %cst_7 {dimension_numbers = #tpu.dot_dimension_numbers<[1], [0], [0], [1], [0, 0, 1, 1], [], []>} : vector<16x128xf32>, vector<128x128xf32>, vector<16x128xf32> -> vector<16x128xf32>
    %6 = arith.addf %2, %5 : vector<16x128xf32>
    %c0_8 = arith.constant 0 : index
    %c0_9 = arith.constant 0 : index
    %7 = vector.load %arg5[%c0_8, %c0_9] : memref<1x128xf32, #tpu.memory_space<vmem>>, vector<1x128xf32>
    %8 = vector.broadcast %7 : vector<1x128xf32> to vector<16x128xf32>
    %9 = arith.addf %6, %8 : vector<16x128xf32>
    %cst_10 = arith.constant 5.000000e-01 : f32
    %10 = vector.broadcast %cst_10 : f32 to vector<16x128xf32>
    %11 = arith.mulf %10, %9 : vector<16x128xf32>
    %cst_11 = arith.constant 0.707106769 : f32
    %12 = vector.broadcast %cst_11 : f32 to vector<16x128xf32>
    %13 = arith.mulf %9, %12 : vector<16x128xf32>
    %14 = math.erf %13 : vector<16x128xf32>
    %cst_12 = arith.constant 1.000000e+00 : f32
    %15 = vector.broadcast %cst_12 : f32 to vector<16x128xf32>
    %16 = arith.addf %15, %14 : vector<16x128xf32>
    %17 = arith.mulf %11, %16 : vector<16x128xf32>
    %c0_13 = arith.constant 0 : index
    %c0_14 = arith.constant 0 : index
    %18 = vector.load %arg6[%c0_13, %c0_14] : memref<128x128xf32, #tpu.memory_space<vmem>>, vector<128x128xf32>
    %cst_15 = arith.constant dense<0.000000e+00> : vector<16x128xf32>
    %19 = tpu.matmul %17, %18, %cst_15 {dimension_numbers = #tpu.dot_dimension_numbers<[1], [0], [0], [1], [0, 0, 1, 1], [], []>} : vector<16x128xf32>, vector<128x128xf32>, vector<16x128xf32> -> vector<16x128xf32>
    %c0_16 = arith.constant 0 : index
    %c0_17 = arith.constant 0 : index
    %20 = vector.load %arg7[%c0_16, %c0_17] : memref<1x128xf32, #tpu.memory_space<vmem>>, vector<1x128xf32>
    %21 = vector.broadcast %20 : vector<1x128xf32> to vector<16x128xf32>
    %22 = arith.addf %19, %21 : vector<16x128xf32>
    %c0_18 = arith.constant 0 : index
    %c0_19 = arith.constant 0 : index
    %23 = vector.load %arg8[%c0_18, %c0_19] : memref<16x128xf32, #tpu.memory_space<vmem>>, vector<16x128xf32>
    tpu.vector_store %arg8[%c0_18, %c0_19], %22 {strides = array<i32>} : memref<16x128xf32, #tpu.memory_space<vmem>>, vector<16x128xf32>,
    return
  }
  func.func @transform_0(%arg0: i32) -> (i32, i32) {
    %c0_i32 = arith.constant 0 : i32
    %c0_i32_0 = arith.constant 0 : i32
    return %arg0, %c0_i32 : i32, i32
  }
  func.func @transform_1(%arg0: i32) -> (i32, i32) {
    %c0_i32 = arith.constant 0 : i32
    %c0_i32_0 = arith.constant 0 : i32
    return %arg0, %c0_i32 : i32, i32
  }
  func.func @transform_2(%arg0: i32) -> (i32, i32) {
    %c0_i32 = arith.constant 0 : i32
    %c0_i32_0 = arith.constant 0 : i32
    %c0_i32_1 = arith.constant 0 : i32
    return %c0_i32, %c0_i32_0 : i32, i32
  }
  func.func @transform_3(%arg0: i32) -> (i32, i32) {
    %c0_i32 = arith.constant 0 : i32
    %c0_i32_0 = arith.constant 0 : i32
    %c0_i32_1 = arith.constant 0 : i32
    return %c0_i32, %c0_i32_0 : i32, i32
  }
  func.func @transform_4(%arg0: i32) -> (i32, i32) {
    %c0_i32 = arith.constant 0 : i32
    %c0_i32_0 = arith.constant 0 : i32
    %c0_i32_1 = arith.constant 0 : i32
    return %c0_i32, %c0_i32_0 : i32, i32
  }
  func.func @transform_5(%arg0: i32) -> (i32, i32) {
    %c0_i32 = arith.constant 0 : i32
    %c0_i32_0 = arith.constant 0 : i32
    %c0_i32_1 = arith.constant 0 : i32
    return %c0_i32, %c0_i32_0 : i32, i32
  }
  func.func @transform_6(%arg0: i32) -> (i32, i32) {
    %c0_i32 = arith.constant 0 : i32
    %c0_i32_0 = arith.constant 0 : i32
    %c0_i32_1 = arith.constant 0 : i32
    return %c0_i32, %c0_i32_0 : i32, i32
  }
  func.func @transform_7(%arg0: i32) -> (i32, i32) {
    %c0_i32 = arith.constant 0 : i32
    %c0_i32_0 = arith.constant 0 : i32
    return %arg0, %c0_i32 : i32, i32
  }
}

</mosaic_0001>

<llo_original>
// kernel: tpu_custom_call.1
$region0: #{tpu_custom_call.1}
  #allocation0 [shape = 'u32[]', space=smem, size = 0x4, offset = 0x4, fixed_abs, tag = 'smem constant byte address 0x4 - core index']
  #allocation1 [shape = 'u32[144,128]{1,0:T(1,128)}', space=vmem, size = 0x12000, scoped, tag = 'internal scratch']
  %s0 = inlined_call_operand.hbm [shape: f32[18,128], index: 0, kind: input, shape index: {}]
  %s1 = inlined_call_operand.hbm [shape: f32[18,128], index: 1, kind: input, shape index: {}]
  %s2 = inlined_call_operand.hbm [shape: f32[128,128], index: 2, kind: input, shape index: {}]
  %s3 = inlined_call_operand.hbm [shape: f32[128,128], index: 3, kind: input, shape index: {}]
  %s4 = inlined_call_operand.vmem [shape: f32[1,128], index: 4, kind: input, shape index: {}]
  %s5 = inlined_call_operand.hbm [shape: f32[128,128], index: 5, kind: input, shape index: {}]
  %s6 = inlined_call_operand.vmem [shape: f32[1,128], index: 6, kind: input, shape index: {}]
  %s7 = inlined_call_operand.hbm [shape: f32[18,128], index: 7, kind: output, shape index: {}]
  %s8 = sld [smem:[#allocation0]]
  $region81: #{tpu_custom_call.1} parent=0
    _
  %s10 = ssub.s32 1, %s8
  %s11 = scalar_select 0, %s10, %s8
  $region1: #{tpu_custom_call.1} parent=0
    #allocation2 [shape = 'u8[16384]{0}', space=vmem, size = 0x4000, scoped, tag = 'input window, operand 0']
    #allocation3 [shape = 's32[2]{0}', space=sflag, size = 0x8, scoped, tag = 'scoped memory for tpu_custom_call.1']
    #allocation4 [shape = 's32[2]{0}', space=sflag, size = 0x8, scoped, tag = 'scoped memory for tpu_custom_call.1']
    #allocation5 [shape = 'u8[16384]{0}', space=vmem, size = 0x4000, scoped, tag = 'input window, operand 1']
    #allocation6 [shape = 's32[2]{0}', space=sflag, size = 0x8, scoped, tag = 'scoped memory for tpu_custom_call.1']
    #allocation7 [shape = 'u8[65536]{0}', space=vmem, size = 0x10000, scoped, tag = 'input window, operand 2, single buffered']
    #allocation8 [shape = 'u8[65536]{0}', space=vmem, size = 0x10000, scoped, tag = 'input window, operand 3, single buffered']
    #allocation9 [shape = 's32[1]{0}', space=sflag, size = 0x4, scoped, tag = 'scoped memory for tpu_custom_call.1']
    #allocation10 [shape = 'u8[65536]{0}', space=vmem, size = 0x10000, scoped, tag = 'input window, operand 5, single buffered']
    #allocation11 [shape = 'u8[16384]{0}', space=vmem, size = 0x4000, scoped, tag = 'output window, operand 0']
    %12 = vsyncpa [#allocation3], 0
    %s13 = scalar_lea.sflag [#allocation3], 1
    %14 = vsyncpa %s13, 0
    %15 = vsyncpa [#allocation6], 0
    %s16 = scalar_lea.sflag [#allocation6], 1
    %17 = vsyncpa %s16, 0
    %18 = vsyncpa [#allocation9], 0
    %19 = vsyncpa [#allocation4], 0
    %s20 = scalar_lea.sflag [#allocation4], 1
    %21 = vsyncpa %s20, 0
    loop: start=0, step=1, limit=4
    $region2: #{tpu_custom_call.1} parent=1 // loop_pre_header
      _
    $region3: #{tpu_custom_call.1} parent=1 // loop_header
      %s23 = sphi 0, %s27
      %p24 = scmp.ge.s32.totalorder %s23, 4
      %s33 = sphi 0, %s35
      %s36 = sphi 0, %s33
      %s37 = sphi 0, %s36
      %s53 = sphi 0, %s37
      %s59 = sphi 0, %s61
      %s62 = sphi 0, %s59
      %s63 = sphi 0, %s62
      %s79 = sphi 0, %s63
      %s83 = sphi 0, %s83
      %s85 = sphi 0, %s83
      %s86 = sphi 0, %s85
      %s100 = sphi 0, %s86
      %s104 = sphi 0, %s104
      %s106 = sphi 0, %s104
      %s107 = sphi 0, %s106
      %s121 = sphi 0, %s107
      %s125 = sphi 0, %s125
      %s127 = sphi 0, %s125
      %s128 = sphi 0, %s127
      %s142 = sphi 0, %s128
      %s146 = sphi 0, %s146
      %s148 = sphi 0, %s146
      %s149 = sphi 0, %s148
      %s163 = sphi 0, %s149
      %s167 = sphi 0, %s167
      %s169 = sphi 0, %s167
      %s170 = sphi 0, %s169
      %s184 = sphi 0, %s170
      %s190 = sphi 0, %s192
      %s193 = sphi 0, %s190
      %s194 = sphi 0, %s193
      %s210 = sphi 0, %s194
    $region4: #{tpu_custom_call.1} parent=1 // loop_header_branch
      %26 = sbr.rel (%p24) target = $region8
    $region5: #{tpu_custom_call.1} parent=1 // loop_body
      %s28 = ssub.s32 %s23, 1
      %s29 = ssub.s32 %s23, 2
      %s30 = sadd.s32 %s23, 1
      %s31 = ssub.s32 %s23, %s30
      %p32 = scmp.eq.s32.totalorder %s31, 0
      %s34 = sadd.s32 %s33, 1
      %s35 = scalar_select %p32, %s33, %s34
      %p38 = pneg %p32
      %p39 = scmp.eq.s32.totalorder %s23, 1
      %p40 = por %p38, %p39
      %p41 = scmp.ne.s32.totalorder %s33, %s36
      %p42 = scmp.eq.s32.totalorder %s23, 0
      %p43 = por %p41, %p42
      %p44 = scmp.ne.s32.totalorder %s33, %s36
      %p45 = scmp.eq.s32.totalorder %s28, 1
      %p46 = por %p44, %p45
      %p47 = scmp.ne.s32.totalorder %s36, %s37
      %p48 = scmp.eq.s32.totalorder %s28, 0
      %p49 = por %p47, %p48
      %p50 = scmp.ne.s32.totalorder %s36, %s37
      %p51 = scmp.eq.s32.totalorder %s29, 1
      %p52 = por %p50, %p51
      %p54 = scmp.ne.s32.totalorder %s37, %s53
      %p55 = scmp.eq.s32.totalorder %s29, 0
      %p56 = por %p54, %p55
      %s57 = ssub.s32 %s23, %s30
      %p58 = scmp.eq.s32.totalorder %s57, 0
      %s60 = sadd.s32 %s59, 1
      %s61 = scalar_select %p58, %s59, %s60
      %p64 = pneg %p58
      %p65 = scmp.eq.s32.totalorder %s23, 1
      %p66 = por %p64, %p65
      %p67 = scmp.ne.s32.totalorder %s59, %s62
      %p68 = scmp.eq.s32.totalorder %s23, 0
      %p69 = por %p67, %p68
      %p70 = scmp.ne.s32.totalorder %s59, %s62
      %p71 = scmp.eq.s32.totalorder %s28, 1
      %p72 = por %p70, %p71
      %p73 = scmp.ne.s32.totalorder %s62, %s63
      %p74 = scmp.eq.s32.totalorder %s28, 0
      %p75 = por %p73, %p74
      %p76 = scmp.ne.s32.totalorder %s62, %s63
      %p77 = scmp.eq.s32.totalorder %s29, 1
      %p78 = por %p76, %p77
      %p80 = scmp.ne.s32.totalorder %s63, %s79
      %p81 = scmp.eq.s32.totalorder %s29, 0
      %p82 = por %p80, %p81
      %s84 = sadd.s32 %s83, 1
      %p87 = scmp.eq.s32.totalorder %s23, 1
      %p88 = scmp.ne.s32.totalorder %s83, %s85
      %p89 = scmp.eq.s32.totalorder %s23, 0
      %p90 = por %p88, %p89
      %p91 = scmp.ne.s32.totalorder %s83, %s85
      %p92 = scmp.eq.s32.totalorder %s28, 1
      %p93 = por %p91, %p92
      %p94 = scmp.ne.s32.totalorder %s85, %s86
      %p95 = scmp.eq.s32.totalorder %s28, 0
      %p96 = por %p94, %p95
      %p97 = scmp.ne.s32.totalorder %s85, %s86
      %p98 = scmp.eq.s32.totalorder %s29, 1
      %p99 = por %p97, %p98
      %p101 = scmp.ne.s32.totalorder %s86, %s100
      %p102 = scmp.eq.s32.totalorder %s29, 0
      %p103 = por %p101, %p102
      %s105 = sadd.s32 %s104, 1
      %p108 = scmp.eq.s32.totalorder %s23, 1
      %p109 = scmp.ne.s32.totalorder %s104, %s106
      %p110 = scmp.eq.s32.totalorder %s23, 0
      %p111 = por %p109, %p110
      %p112 = scmp.ne.s32.totalorder %s104, %s106
      %p113 = scmp.eq.s32.totalorder %s28, 1
      %p114 = por %p112, %p113
      %p115 = scmp.ne.s32.totalorder %s106, %s107
      %p116 = scmp.eq.s32.totalorder %s28, 0
      %p117 = por %p115, %p116
      %p118 = scmp.ne.s32.totalorder %s106, %s107
      %p119 = scmp.eq.s32.totalorder %s29, 1
      %p120 = por %p118, %p119
      %p122 = scmp.ne.s32.totalorder %s107, %s121
      %p123 = scmp.eq.s32.totalorder %s29, 0
      %p124 = por %p122, %p123
      %s126 = sadd.s32 %s125, 1
      %p129 = scmp.eq.s32.totalorder %s23, 1
      %p130 = scmp.ne.s32.totalorder %s125, %s127
      %p131 = scmp.eq.s32.totalorder %s23, 0
      %p132 = por %p130, %p131
      %p133 = scmp.ne.s32.totalorder %s125, %s127
      %p134 = scmp.eq.s32.totalorder %s28, 1
      %p135 = por %p133, %p134
      %p136 = scmp.ne.s32.totalorder %s127, %s128
      %p137 = scmp.eq.s32.totalorder %s28, 0
      %p138 = por %p136, %p137
      %p139 = scmp.ne.s32.totalorder %s127, %s128
      %p140 = scmp.eq.s32.totalorder %s29, 1
      %p141 = por %p139, %p140
      %p143 = scmp.ne.s32.totalorder %s128, %s142
      %p144 = scmp.eq.s32.totalorder %s29, 0
      %p145 = por %p143, %p144
      %s147 = sadd.s32 %s146, 1
      %p150 = scmp.eq.s32.totalorder %s23, 1
      %p151 = scmp.ne.s32.totalorder %s146, %s148
      %p152 = scmp.eq.s32.totalorder %s23, 0
      %p153 = por %p151, %p152
      %p154 = scmp.ne.s32.totalorder %s146, %s148
      %p155 = scmp.eq.s32.totalorder %s28, 1
      %p156 = por %p154, %p155
      %p157 = scmp.ne.s32.totalorder %s148, %s149
      %p158 = scmp.eq.s32.totalorder %s28, 0
      %p159 = por %p157, %p158
      %p160 = scmp.ne.s32.totalorder %s148, %s149
      %p161 = scmp.eq.s32.totalorder %s29, 1
      %p162 = por %p160, %p161
      %p164 = scmp.ne.s32.totalorder %s149, %s163
      %p165 = scmp.eq.s32.totalorder %s29, 0
      %p166 = por %p164, %p165
      %s168 = sadd.s32 %s167, 1
      %p171 = scmp.eq.s32.totalorder %s23, 1
      %p172 = scmp.ne.s32.totalorder %s167, %s169
      %p173 = scmp.eq.s32.totalorder %s23, 0
      %p174 = por %p172, %p173
      %p175 = scmp.ne.s32.totalorder %s167, %s169
      %p176 = scmp.eq.s32.totalorder %s28, 1
      %p177 = por %p175, %p176
      %p178 = scmp.ne.s32.totalorder %s169, %s170
      %p179 = scmp.eq.s32.totalorder %s28, 0
      %p180 = por %p178, %p179
      %p181 = scmp.ne.s32.totalorder %s169, %s170
      %p182 = scmp.eq.s32.totalorder %s29, 1
      %p183 = por %p181, %p182
      %p185 = scmp.ne.s32.totalorder %s170, %s184
      %p186 = scmp.eq.s32.totalorder %s29, 0
      %p187 = por %p185, %p186
      %s188 = ssub.s32 %s23, %s30
      %p189 = scmp.eq.s32.totalorder %s188, 0
      %s191 = sadd.s32 %s190, 1
      %s192 = scalar_select %p189, %s190, %s191
      %p195 = pneg %p189
      %p196 = scmp.eq.s32.totalorder %s23, 1
      %p197 = por %p195, %p196
      %p198 = scmp.ne.s32.totalorder %s190, %s193
      %p199 = scmp.eq.s32.totalorder %s23, 0
      %p200 = por %p198, %p199
      %p201 = scmp.ne.s32.totalorder %s190, %s193
      %p202 = scmp.eq.s32.totalorder %s28, 1
      %p203 = por %p201, %p202
      %p204 = scmp.ne.s32.totalorder %s193, %s194
      %p205 = scmp.eq.s32.totalorder %s28, 0
      %p206 = por %p204, %p205
      %p207 = scmp.ne.s32.totalorder %s193, %s194
      %p208 = scmp.eq.s32.totalorder %s29, 1
      %p209 = por %p207, %p208
      %p211 = scmp.ne.s32.totalorder %s194, %s210
      %p212 = scmp.eq.s32.totalorder %s29, 0
      %p213 = por %p211, %p212
      %p214 = scmp.le.s32.totalorder 1, %s23
      %p215 = scmp.lt.s32.totalorder %s23, 3
      %p216 = pnand %p214, %p215
      %p217 = pneg %p216
      // Predicated region
      $region9: #{tpu_custom_call.1} parent=5 // pred_check
        _
      $region10: #{tpu_custom_call.1} parent=5 // pred_check_branch
        %219 = sbr.rel (%p216) target = $region12
      $region11: #{tpu_custom_call.1} parent=5 // pred_region
        %s220 = ssub.s32 %s23, 1
        // Predicated region
        $region13: #{tpu_custom_call.1} parent=11 // pred_check
          %p221 = pneg %p96
        $region14: #{tpu_custom_call.1} parent=11 // pred_check_branch
          %223 = sbr.rel (%p221) target = $region16
        $region15: #{tpu_custom_call.1} parent=11 // pred_region
          %s225 = ssub.s32 2048, 2048
          %226 = vsyncadd [#allocation6], %s225
          %s227 = sshll.u32 [#allocation7], 4
          %s228 = int_to_ptr.vmem [resolvable:$true] %s227
          %233 = dma.hbm_to_vmem [thread:$0]  %s2, 2048, %s228, [#allocation6], 128, 128, 8
        $region16: #{tpu_custom_call.1} parent=11 // pred_fallthru
          _
        // Predicated region
        $region17: #{tpu_custom_call.1} parent=11 // pred_check
          %p234 = pneg %p117
        $region18: #{tpu_custom_call.1} parent=11 // pred_check_branch
          %236 = sbr.rel (%p234) target = $region20
        $region19: #{tpu_custom_call.1} parent=11 // pred_region
          %s238 = ssub.s32 2048, 2048
          %239 = vsyncadd [#allocation9], %s238
          %s240 = sshll.u32 [#allocation8], 4
          %s241 = int_to_ptr.vmem [resolvable:$true] %s240
          %246 = dma.hbm_to_vmem [thread:$0]  %s3, 2048, %s241, [#allocation9], 128, 128, 8
        $region20: #{tpu_custom_call.1} parent=11 // pred_fallthru
          _
        // Predicated region
        $region21: #{tpu_custom_call.1} parent=11 // pred_check
          %p247 = pneg %p138
        $region22: #{tpu_custom_call.1} parent=11 // pred_check_branch
          %249 = sbr.rel (%p247) target = $region24
        $region23: #{tpu_custom_call.1} parent=11 // pred_region
          _
        $region24: #{tpu_custom_call.1} parent=11 // pred_fallthru
          _
        // Predicated region
        $region25: #{tpu_custom_call.1} parent=11 // pred_check
          %p250 = pneg %p159
        $region26: #{tpu_custom_call.1} parent=11 // pred_check_branch
          %252 = sbr.rel (%p250) target = $region28
        $region27: #{tpu_custom_call.1} parent=11 // pred_region
          %s254 = ssub.s32 2048, 2048
          %255 = vsyncadd [#allocation9], %s254
          %s256 = sshll.u32 [#allocation10], 4
          %s257 = int_to_ptr.vmem [resolvable:$true] %s256
          %262 = dma.hbm_to_vmem [thread:$0]  %s5, 2048, %s257, [#allocation9], 128, 128, 8
        $region28: #{tpu_custom_call.1} parent=11 // pred_fallthru
          _
        // Predicated region
        $region29: #{tpu_custom_call.1} parent=11 // pred_check
          %p263 = pneg %p180
        $region30: #{tpu_custom_call.1} parent=11 // pred_check_branch
          %265 = sbr.rel (%p263) target = $region32
        $region31: #{tpu_custom_call.1} parent=11 // pred_region
          _
        $region32: #{tpu_custom_call.1} parent=11 // pred_fallthru
          _
      $region12: #{tpu_custom_call.1} parent=5 // pred_fallthru
        _
      %p266 = scmp.lt.s32.totalorder %s23, 2
      // Predicated region
      $region33: #{tpu_custom_call.1} parent=5 // pred_check
        %p267 = pneg %p266
      $region34: #{tpu_custom_call.1} parent=5 // pred_check_branch
        %269 = sbr.rel (%p267) target = $region36
      $region35: #{tpu_custom_call.1} parent=5 // pred_region
        // Predicated region
        $region37: #{tpu_custom_call.1} parent=35 // pred_check
          %p270 = pneg %p43
        $region38: #{tpu_custom_call.1} parent=35 // pred_check_branch
          %272 = sbr.rel (%p270) target = $region40
        $region39: #{tpu_custom_call.1} parent=35 // pred_region
          %s273 = sand.u32 %s33, 1
          %s274 = scalar_lea.sflag [#allocation3], %s273
          %s275 = sand.u32 %s33, 1
          %s276 = smul.addr %s275, 16
          %s277 = scalar_lea.vmem [#allocation2], %s276
          %s278 = smul.u32 2, %s23
          %s279 = ssub.s32 3, %s278
          %p280 = scmp.lt.s32.totalorder %s279, 2
          %s281 = scalar_select %p280, %s279, 2
          %s282 = smul.u32 128, %s281
          %s284 = ssub.s32 256, %s282
          %285 = vsyncadd %s274, %s284
          %p286 = scmp.ne.s32.totalorder 0, %s282
          %s287 = smul.addr %s278, 128
          %s288 = scalar_lea.hbm %s0, %s287
          %s289 = smul.u32 8, %s281
          %s290 = sshll.u32 %s277, 4
          %s291 = int_to_ptr.vmem [resolvable:$true] %s290
          %s292 = sshll.u32 %s289, 4
          %296 = dma.hbm_to_vmem [thread:$0]  (%p286), %s288, %s292, %s291, %s274, 128, 128, 8
        $region40: #{tpu_custom_call.1} parent=35 // pred_fallthru
          _
        // Predicated region
        $region41: #{tpu_custom_call.1} parent=35 // pred_check
          %p297 = pneg %p69
        $region42: #{tpu_custom_call.1} parent=35 // pred_check_branch
          %299 = sbr.rel (%p297) target = $region44
        $region43: #{tpu_custom_call.1} parent=35 // pred_region
          %s300 = sand.u32 %s23, 1
          %s301 = scalar_lea.sflag [#allocation6], %s300
          %s302 = sand.u32 %s59, 1
          %s303 = smul.addr %s302, 16
          %s304 = scalar_lea.vmem [#allocation5], %s303
          %s305 = smul.u32 2, %s23
          %s306 = ssub.s32 3, %s305
          %p307 = scmp.lt.s32.totalorder %s306, 2
          %s308 = scalar_select %p307, %s306, 2
          %s309 = smul.u32 128, %s308
          %s311 = ssub.s32 256, %s309
          %312 = vsyncadd %s301, %s311
          %p313 = scmp.ne.s32.totalorder 0, %s309
          %s314 = smul.addr %s305, 128
          %s315 = scalar_lea.hbm %s1, %s314
          %s316 = smul.u32 8, %s308
          %s317 = sshll.u32 %s304, 4
          %s318 = int_to_ptr.vmem [resolvable:$true] %s317
          %s319 = sshll.u32 %s316, 4
          %323 = dma.hbm_to_vmem [thread:$0]  (%p313), %s315, %s319, %s318, %s301, 128, 128, 8
        $region44: #{tpu_custom_call.1} parent=35 // pred_fallthru
          _
      $region36: #{tpu_custom_call.1} parent=5 // pred_fallthru
        _
      %p324 = scmp.le.s32.totalorder 1, %s23
      %p325 = scmp.lt.s32.totalorder %s23, 3
      %p326 = pnand %p324, %p325
      %p327 = pneg %p326
      // Predicated region
      $region45: #{tpu_custom_call.1} parent=5 // pred_check
        _
      $region46: #{tpu_custom_call.1} parent=5 // pred_check_branch
        %329 = sbr.rel (%p326) target = $region48
      $region47: #{tpu_custom_call.1} parent=5 // pred_region
        %s330 = ssub.s32 %s23, 1
        %s331 = sand.u32 %s36, 1
        %s332 = scalar_lea.sflag [#allocation3], %s331
        %s333 = sand.u32 %s36, 1
        %s334 = smul.addr %s333, 16
        %s335 = scalar_lea.vmem [#allocation2], %s334
        // Predicated region
        $region49: #{tpu_custom_call.1} parent=47 // pred_check
          %p336 = pneg %p49
        $region50: #{tpu_custom_call.1} parent=47 // pred_check_branch
          %338 = sbr.rel (%p336) target = $region52
        $region51: #{tpu_custom_call.1} parent=47 // pred_region
          %339 = dma.done %s332, 256
        $region52: #{tpu_custom_call.1} parent=47 // pred_fallthru
          _
        %s340 = sand.u32 %s28, 1
        %s341 = scalar_lea.sflag [#allocation6], %s340
        %s342 = sand.u32 %s62, 1
        %s343 = smul.addr %s342, 16
        %s344 = scalar_lea.vmem [#allocation5], %s343
        // Predicated region
        $region53: #{tpu_custom_call.1} parent=47 // pred_check
          %p345 = pneg %p75
        $region54: #{tpu_custom_call.1} parent=47 // pred_check_branch
          %347 = sbr.rel (%p345) target = $region56
        $region55: #{tpu_custom_call.1} parent=47 // pred_region
          %348 = dma.done %s341, 256
        $region56: #{tpu_custom_call.1} parent=47 // pred_fallthru
          _
        // Predicated region
        $region57: #{tpu_custom_call.1} parent=47 // pred_check
          %p349 = pneg %p96
        $region58: #{tpu_custom_call.1} parent=47 // pred_check_branch
          %351 = sbr.rel (%p349) target = $region60
        $region59: #{tpu_custom_call.1} parent=47 // pred_region
          %352 = dma.done [#allocation6], 2048
        $region60: #{tpu_custom_call.1} parent=47 // pred_fallthru
          _
        // Predicated region
        $region61: #{tpu_custom_call.1} parent=47 // pred_check
          %p353 = pneg %p117
        $region62: #{tpu_custom_call.1} parent=47 // pred_check_branch
          %355 = sbr.rel (%p353) target = $region64
        $region63: #{tpu_custom_call.1} parent=47 // pred_region
          %356 = dma.done [#allocation9], 2048
        $region64: #{tpu_custom_call.1} parent=47 // pred_fallthru
          _
        // Predicated region
        $region65: #{tpu_custom_call.1} parent=47 // pred_check
          %p357 = pneg %p159
        $region66: #{tpu_custom_call.1} parent=47 // pred_check_branch
          %359 = sbr.rel (%p357) target = $region68
        $region67: #{tpu_custom_call.1} parent=47 // pred_region
          %360 = dma.done [#allocation9], 2048
        $region68: #{tpu_custom_call.1} parent=47 // pred_fallthru
          _
        %s361 = sand.u32 %s36, 1
        %s362 = scalar_lea.sflag [#allocation3], %s361
        %s363 = sand.u32 %s36, 1
        %s364 = smul.addr %s363, 16
        %s365 = scalar_lea.vmem [#allocation2], %s364
        %p366 = pneg %p49
        %p367 = pneg %p46
        %s368 = sand.u32 %s28, 1
        %s369 = scalar_lea.sflag [#allocation6], %s368
        %s370 = sand.u32 %s62, 1
        %s371 = smul.addr %s370, 16
        %s372 = scalar_lea.vmem [#allocation5], %s371
        %p373 = pneg %p75
        %p374 = pneg %p72
        %p375 = pneg %p96
        %p376 = pneg %p93
        %p377 = pneg %p117
        %p378 = pneg %p114
        %p379 = pneg %p138
        %p380 = pneg %p135
        %p381 = pneg %p159
        %p382 = pneg %p156
        %p383 = pneg %p180
        %p384 = pneg %p177
        %p385 = pneg %p206
        %p386 = pneg %p203
        %s387 = sand.u32 %s193, 1
        %s388 = scalar_lea.sflag [#allocation4], %s387
        %s389 = sand.u32 %s193, 1
        %s390 = smul.addr %s389, 16
        %s391 = scalar_lea.vmem [#allocation11], %s390
        %s392 = smul.u32 2, %s28
        %s393 = ssub.s32 3, %s392
        %p394 = scmp.lt.s32.totalorder %s393, 2
        %s395 = scalar_select %p394, %s393, 2
        %s396 = smul.u32 128, %s395
        %s397 = smul.u32 2, %s28
        %s398 = ssub.s32 3, %s397
        %p399 = scmp.lt.s32.totalorder %s398, 2
        %s400 = scalar_select %p399, %s398, 2
        %s401 = smul.u32 128, %s400
        %s402 = smul.u32 2, %s28
        %s403 = ssub.s32 3, %s402
        %p404 = scmp.lt.s32.totalorder %s403, 2
        %s405 = scalar_select %p404, %s403, 2
        %s406 = smul.u32 128, %s405
        %v407 = vld [vmem:[%s335] sm:$0xff]
        %v408 = vld [vmem:[%s335 + $0x8] sm:$0xff]
        %v409 = vld [vmem:[#allocation7] sm:$0xff]
        %v410 = vld [vmem:[#allocation7 + $0x8] sm:$0xff]
        %v411 = vld [vmem:[#allocation7 + $0x10] sm:$0xff]
        %v412 = vld [vmem:[#allocation7 + $0x18] sm:$0xff]
        %v413 = vld [vmem:[#allocation7 + $0x20] sm:$0xff]
        %v414 = vld [vmem:[#allocation7 + $0x28] sm:$0xff]
        %v415 = vld [vmem:[#allocation7 + $0x30] sm:$0xff]
        %v416 = vld [vmem:[#allocation7 + $0x38] sm:$0xff]
        %v417 = vld [vmem:[#allocation7 + $0x40] sm:$0xff]
        %v418 = vld [vmem:[#allocation7 + $0x48] sm:$0xff]
        %v419 = vld [vmem:[#allocation7 + $0x50] sm:$0xff]
        %v420 = vld [vmem:[#allocation7 + $0x58] sm:$0xff]
        %v421 = vld [vmem:[#allocation7 + $0x60] sm:$0xff]
        %v422 = vld [vmem:[#allocation7 + $0x68] sm:$0xff]
        %v423 = vld [vmem:[#allocation7 + $0x70] sm:$0xff]
        %v424 = vld [vmem:[#allocation7 + $0x78] sm:$0xff]
        %v425 = vld [vmem:[%s344] sm:$0xff]
        %v426 = vld [vmem:[%s344 + $0x8] sm:$0xff]
        %v427 = vld [vmem:[#allocation8] sm:$0xff]
        %v428 = vld [vmem:[#allocation8 + $0x8] sm:$0xff]
        %v429 = vld [vmem:[#allocation8 + $0x10] sm:$0xff]
        %v430 = vld [vmem:[#allocation8 + $0x18] sm:$0xff]
        %v431 = vld [vmem:[#allocation8 + $0x20] sm:$0xff]
        %v432 = vld [vmem:[#allocation8 + $0x28] sm:$0xff]
        %v433 = vld [vmem:[#allocation8 + $0x30] sm:$0xff]
        %v434 = vld [vmem:[#allocation8 + $0x38] sm:$0xff]
        %v435 = vld [vmem:[#allocation8 + $0x40] sm:$0xff]
        %v436 = vld [vmem:[#allocation8 + $0x48] sm:$0xff]
        %v437 = vld [vmem:[#allocation8 + $0x50] sm:$0xff]
        %v438 = vld [vmem:[#allocation8 + $0x58] sm:$0xff]
        %v439 = vld [vmem:[#allocation8 + $0x60] sm:$0xff]
        %v440 = vld [vmem:[#allocation8 + $0x68] sm:$0xff]
        %v441 = vld [vmem:[#allocation8 + $0x70] sm:$0xff]
        %v442 = vld [vmem:[#allocation8 + $0x78] sm:$0xff]
        %443 = vmatprep.subr.mxu0 0.0
        %444 = vmatpush1.msra.mxu0 %v442
        %445 = vmatprep.subr.mxu0 0.0
        %446 = vmatpush1.msra.mxu0 %v441
        %447 = vmatprep.subr.mxu0 0.0
        %448 = vmatpush1.msra.mxu0 %v440
        %449 = vmatprep.subr.mxu0 0.0
        %450 = vmatpush1.msra.mxu0 %v439
        %451 = vmatprep.subr.mxu0 0.0
        %452 = vmatpush1.msra.mxu0 %v438
        %453 = vmatprep.subr.mxu0 0.0
        %454 = vmatpush1.msra.mxu0 %v437
        %455 = vmatprep.subr.mxu0 0.0
        %456 = vmatpush1.msra.mxu0 %v436
        %457 = vmatprep.subr.mxu0 0.0
        %458 = vmatpush1.msra.mxu0 %v435
        %459 = vmatprep.subr.mxu0 0.0
        %460 = vmatpush1.msra.mxu0 %v434
        %461 = vmatprep.subr.mxu0 0.0
        %462 = vmatpush1.msra.mxu0 %v433
        %463 = vmatprep.subr.mxu0 0.0
        %464 = vmatpush1.msra.mxu0 %v432
        %465 = vmatprep.subr.mxu0 0.0
        %466 = vmatpush1.msra.mxu0 %v431
        %467 = vmatprep.subr.mxu0 0.0
        %468 = vmatpush1.msra.mxu0 %v430
        %469 = vmatprep.subr.mxu0 0.0
        %470 = vmatpush1.msra.mxu0 %v429
        %471 = vmatprep.subr.mxu0 0.0
        %472 = vmatpush1.msra.mxu0 %v428
        %473 = vmatprep.subr.mxu0 0.0
        %474 = vmatpush1.msra.mxu0 %v427
        %475 = vmatprep.subr.mxu0 0.0
        %476 = vmatpush2.msra.mxu0 0.0
        %477 = vmatprep.subr.mxu0 0.0
        %478 = vmatpush2.msra.mxu0 0.0
        %479 = vmatprep.subr.mxu0 0.0
        %480 = vmatpush2.msra.mxu0 0.0
        %481 = vmatprep.subr.mxu0 0.0
        %482 = vmatpush2.msra.mxu0 0.0
        %483 = vmatprep.subr.mxu0 0.0
        %484 = vmatpush2.msra.mxu0 0.0
        %485 = vmatprep.subr.mxu0 0.0
        %486 = vmatpush2.msra.mxu0 0.0
        %487 = vmatprep.subr.mxu0 0.0
        %488 = vmatpush2.msra.mxu0 0.0
        %489 = vmatprep.subr.mxu0 0.0
        %490 = vmatpush2.msra.mxu0 0.0
        %491 = vmatprep.subr.mxu0 0.0
        %492 = vmatpush2.msra.mxu0 0.0
        %493 = vmatprep.subr.mxu0 0.0
        %494 = vmatpush2.msra.mxu0 0.0
        %495 = vmatprep.subr.mxu0 0.0
        %496 = vmatpush2.msra.mxu0 0.0
        %497 = vmatprep.subr.mxu0 0.0
        %498 = vmatpush2.msra.mxu0 0.0
        %499 = vmatprep.subr.mxu0 0.0
        %500 = vmatpush2.msra.mxu0 0.0
        %501 = vmatprep.subr.mxu0 0.0
        %502 = vmatpush2.msra.mxu0 0.0
        %503 = vmatprep.subr.mxu0 0.0
        %504 = vmatpush2.msra.mxu0 0.0
        %505 = vmatprep.subr.mxu0 0.0
        %506 = vmatpush2.msra.mxu0 0.0
        %507 = vmatprep.mubr.f32.mxu0 0.0
        %508 = vmatmul.mubr.f32.gmra.mxu0 %v425
        %v509 = vpop.f32.mrf.mxu0
        %v510 = vadd.f32 0.0, %v509
        %v511 = vpop.f32.mrf.mxu0
        %512 = vmatprep.mubr.f32.mxu0 0.0
        %513 = vmatmul.mubr.f32.gmra.mxu0 %v426
        %v514 = vpop.f32.mrf.mxu0
        %v515 = vadd.f32 0.0, %v514
        %v516 = vpop.f32.mrf.mxu0
        %517 = vdwg.mxu0
        %518 = vmatprep.subr.mxu0 0.0
        %519 = vmatpush1.msra.mxu0 %v424
        %520 = vmatprep.subr.mxu0 0.0
        %521 = vmatpush1.msra.mxu0 %v423
        %522 = vmatprep.subr.mxu0 0.0
        %523 = vmatpush1.msra.mxu0 %v422
        %524 = vmatprep.subr.mxu0 0.0
        %525 = vmatpush1.msra.mxu0 %v421
        %526 = vmatprep.subr.mxu0 0.0
        %527 = vmatpush1.msra.mxu0 %v420
        %528 = vmatprep.subr.mxu0 0.0
        %529 = vmatpush1.msra.mxu0 %v419
        %530 = vmatprep.subr.mxu0 0.0
        %531 = vmatpush1.msra.mxu0 %v418
        %532 = vmatprep.subr.mxu0 0.0
        %533 = vmatpush1.msra.mxu0 %v417
        %534 = vmatprep.subr.mxu0 0.0
        %535 = vmatpush1.msra.mxu0 %v416
        %536 = vmatprep.subr.mxu0 0.0
        %537 = vmatpush1.msra.mxu0 %v415
        %538 = vmatprep.subr.mxu0 0.0
        %539 = vmatpush1.msra.mxu0 %v414
        %540 = vmatprep.subr.mxu0 0.0
        %541 = vmatpush1.msra.mxu0 %v413
        %542 = vmatprep.subr.mxu0 0.0
        %543 = vmatpush1.msra.mxu0 %v412
        %544 = vmatprep.subr.mxu0 0.0
        %545 = vmatpush1.msra.mxu0 %v411
        %546 = vmatprep.subr.mxu0 0.0
        %547 = vmatpush1.msra.mxu0 %v410
        %548 = vmatprep.subr.mxu0 0.0
        %549 = vmatpush1.msra.mxu0 %v409
        %550 = vmatprep.subr.mxu0 0.0
        %551 = vmatpush2.msra.mxu0 0.0
        %552 = vmatprep.subr.mxu0 0.0
        %553 = vmatpush2.msra.mxu0 0.0
        %554 = vmatprep.subr.mxu0 0.0
        %555 = vmatpush2.msra.mxu0 0.0
        %556 = vmatprep.subr.mxu0 0.0
        %557 = vmatpush2.msra.mxu0 0.0
        %558 = vmatprep.subr.mxu0 0.0
        %559 = vmatpush2.msra.mxu0 0.0
        %560 = vmatprep.subr.mxu0 0.0
        %561 = vmatpush2.msra.mxu0 0.0
        %562 = vmatprep.subr.mxu0 0.0
        %563 = vmatpush2.msra.mxu0 0.0
        %564 = vmatprep.subr.mxu0 0.0
        %565 = vmatpush2.msra.mxu0 0.0
        %566 = vmatprep.subr.mxu0 0.0
        %567 = vmatpush2.msra.mxu0 0.0
        %568 = vmatprep.subr.mxu0 0.0
        %569 = vmatpush2.msra.mxu0 0.0
        %570 = vmatprep.subr.mxu0 0.0
        %571 = vmatpush2.msra.mxu0 0.0
        %572 = vmatprep.subr.mxu0 0.0
        %573 = vmatpush2.msra.mxu0 0.0
        %574 = vmatprep.subr.mxu0 0.0
        %575 = vmatpush2.msra.mxu0 0.0
        %576 = vmatprep.subr.mxu0 0.0
        %577 = vmatpush2.msra.mxu0 0.0
        %578 = vmatprep.subr.mxu0 0.0
        %579 = vmatpush2.msra.mxu0 0.0
        %580 = vmatprep.subr.mxu0 0.0
        %581 = vmatpush2.msra.mxu0 0.0
        %582 = vmatprep.mubr.f32.mxu0 0.0
        %583 = vmatmul.mubr.f32.gmra.mxu0 %v407
        %v584 = vpop.f32.mrf.mxu0
        %v585 = vadd.f32 %v510, %v584
        %v586 = vpop.f32.mrf.mxu0
        %587 = vmatprep.mubr.f32.mxu0 0.0
        %588 = vmatmul.mubr.f32.gmra.mxu0 %v408
        %v589 = vpop.f32.mrf.mxu0
        %v590 = vadd.f32 %v515, %v589
        %v591 = vpop.f32.mrf.mxu0
        %592 = vdwg.mxu0
        %v593 = vld [vmem:[%s4] sm:$0x1]
        %v595 = vlaneseq
        %v596 = vshrl.u32 %v595, 7
        %v597 = vsub.s32 0, %v596
        %v598 = vrot.slane %v593, %v597
        %v600 = vadd.f32 %v585, %v598
        %v601 = vadd.f32 %v590, %v598
        %v602 = vmul.f32 %v600, 0.5
        %v603 = vmul.f32 %v601, 0.5
        %v604 = vmul.f32 %v600, 0.70710677
        %v605 = vmul.f32 %v601, 0.70710677
        %v606 = verf.f32.pop %v604
        %v607 = verf.f32.pop %v605
        %v608 = vadd.f32 %v606, 1.0
        %v609 = vadd.f32 %v607, 1.0
        %v610 = vmul.f32 %v602, %v608
        %v611 = vmul.f32 %v603, %v609
        %v612 = vld [vmem:[#allocation10] sm:$0xff]
        %v613 = vld [vmem:[#allocation10 + $0x8] sm:$0xff]
        %v614 = vld [vmem:[#allocation10 + $0x10] sm:$0xff]
        %v615 = vld [vmem:[#allocation10 + $0x18] sm:$0xff]
        %v616 = vld [vmem:[#allocation10 + $0x20] sm:$0xff]
        %v617 = vld [vmem:[#allocation10 + $0x28] sm:$0xff]
        %v618 = vld [vmem:[#allocation10 + $0x30] sm:$0xff]
        %v619 = vld [vmem:[#allocation10 + $0x38] sm:$0xff]
        %v620 = vld [vmem:[#allocation10 + $0x40] sm:$0xff]
        %v621 = vld [vmem:[#allocation10 + $0x48] sm:$0xff]
        %v622 = vld [vmem:[#allocation10 + $0x50] sm:$0xff]
        %v623 = vld [vmem:[#allocation10 + $0x58] sm:$0xff]
        %v624 = vld [vmem:[#allocation10 + $0x60] sm:$0xff]
        %v625 = vld [vmem:[#allocation10 + $0x68] sm:$0xff]
        %v626 = vld [vmem:[#allocation10 + $0x70] sm:$0xff]
        %v627 = vld [vmem:[#allocation10 + $0x78] sm:$0xff]
        %v628 = vld [vmem:[%s6] sm:$0x1]
        %v630 = vlaneseq
        %v631 = vshrl.u32 %v630, 7
        %v632 = vsub.s32 0, %v631
        %v633 = vrot.slane %v628, %v632
        %635 = vmatprep.subr.mxu0 0.0
        %636 = vmatpush1.msra.mxu0 %v627
        %637 = vmatprep.subr.mxu0 0.0
        %638 = vmatpush1.msra.mxu0 %v626
        %639 = vmatprep.subr.mxu0 0.0
        %640 = vmatpush1.msra.mxu0 %v625
        %641 = vmatprep.subr.mxu0 0.0
        %642 = vmatpush1.msra.mxu0 %v624
        %643 = vmatprep.subr.mxu0 0.0
        %644 = vmatpush1.msra.mxu0 %v623
        %645 = vmatprep.subr.mxu0 0.0
        %646 = vmatpush1.msra.mxu0 %v622
        %647 = vmatprep.subr.mxu0 0.0
        %648 = vmatpush1.msra.mxu0 %v621
        %649 = vmatprep.subr.mxu0 0.0
        %650 = vmatpush1.msra.mxu0 %v620
        %651 = vmatprep.subr.mxu0 0.0
        %652 = vmatpush1.msra.mxu0 %v619
        %653 = vmatprep.subr.mxu0 0.0
        %654 = vmatpush1.msra.mxu0 %v618
        %655 = vmatprep.subr.mxu0 0.0
        %656 = vmatpush1.msra.mxu0 %v617
        %657 = vmatprep.subr.mxu0 0.0
        %658 = vmatpush1.msra.mxu0 %v616
        %659 = vmatprep.subr.mxu0 0.0
        %660 = vmatpush1.msra.mxu0 %v615
        %661 = vmatprep.subr.mxu0 0.0
        %662 = vmatpush1.msra.mxu0 %v614
        %663 = vmatprep.subr.mxu0 0.0
        %664 = vmatpush1.msra.mxu0 %v613
        %665 = vmatprep.subr.mxu0 0.0
        %666 = vmatpush1.msra.mxu0 %v612
        %667 = vmatprep.subr.mxu0 0.0
        %668 = vmatpush2.msra.mxu0 0.0
        %669 = vmatprep.subr.mxu0 0.0
        %670 = vmatpush2.msra.mxu0 0.0
        %671 = vmatprep.subr.mxu0 0.0
        %672 = vmatpush2.msra.mxu0 0.0
        %673 = vmatprep.subr.mxu0 0.0
        %674 = vmatpush2.msra.mxu0 0.0
        %675 = vmatprep.subr.mxu0 0.0
        %676 = vmatpush2.msra.mxu0 0.0
        %677 = vmatprep.subr.mxu0 0.0
        %678 = vmatpush2.msra.mxu0 0.0
        %679 = vmatprep.subr.mxu0 0.0
        %680 = vmatpush2.msra.mxu0 0.0
        %681 = vmatprep.subr.mxu0 0.0
        %682 = vmatpush2.msra.mxu0 0.0
        %683 = vmatprep.subr.mxu0 0.0
        %684 = vmatpush2.msra.mxu0 0.0
        %685 = vmatprep.subr.mxu0 0.0
        %686 = vmatpush2.msra.mxu0 0.0
        %687 = vmatprep.subr.mxu0 0.0
        %688 = vmatpush2.msra.mxu0 0.0
        %689 = vmatprep.subr.mxu0 0.0
        %690 = vmatpush2.msra.mxu0 0.0
        %691 = vmatprep.subr.mxu0 0.0
        %692 = vmatpush2.msra.mxu0 0.0
        %693 = vmatprep.subr.mxu0 0.0
        %694 = vmatpush2.msra.mxu0 0.0
        %695 = vmatprep.subr.mxu0 0.0
        %696 = vmatpush2.msra.mxu0 0.0
        %697 = vmatprep.subr.mxu0 0.0
        %698 = vmatpush2.msra.mxu0 0.0
        %699 = vmatprep.mubr.f32.mxu0 0.0
        %700 = vmatmul.mubr.f32.gmra.mxu0 %v610
        %v701 = vpop.f32.mrf.mxu0
        %v702 = vadd.f32 %v633, %v701
        %v703 = vpop.f32.mrf.mxu0
        %704 = vmatprep.mubr.f32.mxu0 0.0
        %705 = vmatmul.mubr.f32.gmra.mxu0 %v611
        %v706 = vpop.f32.mrf.mxu0
        %v707 = vadd.f32 %v633, %v706
        %v708 = vpop.f32.mrf.mxu0
        %709 = vdwg.mxu0
        %710 = vst [vmem:[%s391] sm:$0xff] %v702
        %711 = vst [vmem:[%s391 + $0x8] sm:$0xff] %v707
        %s712 = sand.u32 %s193, 1
        %s713 = scalar_lea.sflag [#allocation4], %s712
        %s714 = sand.u32 %s193, 1
        %s715 = smul.addr %s714, 16
        %s716 = scalar_lea.vmem [#allocation11], %s715
        // Predicated region
        $region69: #{tpu_custom_call.1} parent=47 // pred_check
          %p717 = pneg %p203
        $region70: #{tpu_custom_call.1} parent=47 // pred_check_branch
          %719 = sbr.rel (%p717) target = $region72
        $region71: #{tpu_custom_call.1} parent=47 // pred_region
          %s720 = smul.u32 2, %s28
          %s721 = ssub.s32 3, %s720
          %p722 = scmp.lt.s32.totalorder %s721, 2
          %s723 = scalar_select %p722, %s721, 2
          %s724 = smul.u32 128, %s723
          %s726 = ssub.s32 256, %s724
          %727 = vsyncadd %s713, %s726
          %p728 = scmp.ne.s32.totalorder 0, %s724
          %s729 = smul.addr %s720, 128
          %s730 = scalar_lea.hbm %s7, %s729
          %s731 = smul.u32 8, %s723
          %s732 = sshll.u32 %s716, 4
          %s733 = int_to_ptr.vmem [resolvable:$true] %s732
          %s734 = sshll.u32 %s731, 4
          %738 = dma.vmem_to_hbm [thread:$0]  (%p728), %s733, %s734, %s730, %s713, 128, 128, 8
        $region72: #{tpu_custom_call.1} parent=47 // pred_fallthru
          _
      $region48: #{tpu_custom_call.1} parent=5 // pred_fallthru
        _
      %p739 = scmp.le.s32.totalorder 2, %s23
      // Predicated region
      $region73: #{tpu_custom_call.1} parent=5 // pred_check
        %p740 = pneg %p739
      $region74: #{tpu_custom_call.1} parent=5 // pred_check_branch
        %742 = sbr.rel (%p740) target = $region76
      $region75: #{tpu_custom_call.1} parent=5 // pred_region
        %s743 = ssub.s32 %s23, 2
        // Predicated region
        $region77: #{tpu_custom_call.1} parent=75 // pred_check
          %p744 = pneg %p209
        $region78: #{tpu_custom_call.1} parent=75 // pred_check_branch
          %746 = sbr.rel (%p744) target = $region80
        $region79: #{tpu_custom_call.1} parent=75 // pred_region
          %s747 = sand.u32 %s194, 1
          %s748 = scalar_lea.sflag [#allocation4], %s747
          %s749 = sand.u32 %s194, 1
          %s750 = smul.addr %s749, 16
          %s751 = scalar_lea.vmem [#allocation11], %s750
          %752 = dma.done %s748, 256
        $region80: #{tpu_custom_call.1} parent=75 // pred_fallthru
          _
      $region76: #{tpu_custom_call.1} parent=5 // pred_fallthru
        _
    $region6: #{tpu_custom_call.1} parent=1 // loop_footer
      %s27 = sadd.s32 1, %s23
    $region7: #{tpu_custom_call.1} parent=1 // loop_footer_branch
      %22 = sbr.rel target = $region3
    $region8: #{tpu_custom_call.1} parent=1 // loop_exit
      _
    %753 = vsyncpa [#allocation3], 1
    %s754 = scalar_lea.sflag [#allocation3], 1
    %755 = vsyncpa %s754, 1
    %756 = vsyncpa [#allocation6], 1
    %s757 = scalar_lea.sflag [#allocation6], 1
    %758 = vsyncpa %s757, 1
    %759 = vsyncpa [#allocation9], 1
    %760 = vsyncpa [#allocation4], 1
    %s761 = scalar_lea.sflag [#allocation4], 1
    %762 = vsyncpa %s761, 1

// kernel: tpu_custom_call.1
$region0: #{tpu_custom_call.1}
  #allocation0 [shape = 'u32[]', space=smem, size = 0x4, offset = 0x4, fixed_abs, tag = 'smem constant byte address 0x4 - core index']
  #allocation1 [shape = 'u32[144,128]{1,0:T(1,128)}', space=vmem, size = 0x12000, scoped, tag = 'internal scratch']
  %s0 = inlined_call_operand.hbm [shape: f32[18,128], index: 0, kind: input, shape index: {}]
  %s1 = inlined_call_operand.hbm [shape: f32[18,128], index: 1, kind: input, shape index: {}]
  %s2 = inlined_call_operand.hbm [shape: f32[128,128], index: 2, kind: input, shape index: {}]
  %s3 = inlined_call_operand.hbm [shape: f32[128,128], index: 3, kind: input, shape index: {}]
  %s4 = inlined_call_operand.vmem [shape: f32[1,128], index: 4, kind: input, shape index: {}]
  %s5 = inlined_call_operand.hbm [shape: f32[128,128], index: 5, kind: input, shape index: {}]
  %s6 = inlined_call_operand.vmem [shape: f32[1,128], index: 6, kind: input, shape index: {}]
  %s7 = inlined_call_operand.hbm [shape: f32[18,128], index: 7, kind: output, shape index: {}]
  %s8 = sld [smem:[#allocation0]]
  $region81: #{tpu_custom_call.1} parent=0
    _
  %s10 = ssub.s32 1, %s8
  %s11 = scalar_select 0, %s10, %s8
  $region1: #{tpu_custom_call.1} parent=0
    #allocation2 [shape = 'u8[16384]{0}', space=vmem, size = 0x4000, scoped, tag = 'input window, operand 0']
    #allocation3 [shape = 's32[2]{0}', space=sflag, size = 0x8, scoped, tag = 'scoped memory for tpu_custom_call.1']
    #allocation4 [shape = 's32[2]{0}', space=sflag, size = 0x8, scoped, tag = 'scoped memory for tpu_custom_call.1']
    #allocation5 [shape = 'u8[16384]{0}', space=vmem, size = 0x4000, scoped, tag = 'input window, operand 1']
    #allocation6 [shape = 's32[2]{0}', space=sflag, size = 0x8, scoped, tag = 'scoped memory for tpu_custom_call.1']
    #allocation7 [shape = 'u8[65536]{0}', space=vmem, size = 0x10000, scoped, tag = 'input window, operand 2, single buffered']
    #allocation8 [shape = 'u8[65536]{0}', space=vmem, size = 0x10000, scoped, tag = 'input window, operand 3, single buffered']
    #allocation9 [shape = 's32[1]{0}', space=sflag, size = 0x4, scoped, tag = 'scoped memory for tpu_custom_call.1']
    #allocation10 [shape = 'u8[65536]{0}', space=vmem, size = 0x10000, scoped, tag = 'input window, operand 5, single buffered']
    #allocation11 [shape = 'u8[16384]{0}', space=vmem, size = 0x4000, scoped, tag = 'output window, operand 0']
    %12 = vsyncpa [#allocation3], 0
    %s13 = scalar_lea.sflag [#allocation3], 1
    %14 = vsyncpa %s13, 0
    %15 = vsyncpa [#allocation6], 0
    %s16 = scalar_lea.sflag [#allocation6], 1
    %17 = vsyncpa %s16, 0
    %18 = vsyncpa [#allocation9], 0
    %19 = vsyncpa [#allocation4], 0
    %s20 = scalar_lea.sflag [#allocation4], 1
    %21 = vsyncpa %s20, 0
    loop: start=0, step=1, limit=4
    $region2: #{tpu_custom_call.1} parent=1 // loop_pre_header
      _
    $region3: #{tpu_custom_call.1} parent=1 // loop_header
      %s23 = sphi 0, %s27
      %p24 = scmp.ge.s32.totalorder %s23, 4
      %s33 = sphi 0, %s35
      %s36 = sphi 0, %s33
      %s37 = sphi 0, %s36
      %s53 = sphi 0, %s37
      %s59 = sphi 0, %s61
      %s62 = sphi 0, %s59
      %s63 = sphi 0, %s62
      %s79 = sphi 0, %s63
      %s83 = sphi 0, %s83
      %s85 = sphi 0, %s83
      %s86 = sphi 0, %s85
      %s100 = sphi 0, %s86
      %s104 = sphi 0, %s104
      %s106 = sphi 0, %s104
      %s107 = sphi 0, %s106
      %s121 = sphi 0, %s107
      %s125 = sphi 0, %s125
      %s127 = sphi 0, %s125
      %s128 = sphi 0, %s127
      %s142 = sphi 0, %s128
      %s146 = sphi 0, %s146
      %s148 = sphi 0, %s146
      %s149 = sphi 0, %s148
      %s163 = sphi 0, %s149
      %s167 = sphi 0, %s167
      %s169 = sphi 0, %s167
      %s170 = sphi 0, %s169
      %s184 = sphi 0, %s170
      %s190 = sphi 0, %s192
      %s193 = sphi 0, %s190
      %s194 = sphi 0, %s193
      %s210 = sphi 0, %s194
    $region4: #{tpu_custom_call.1} parent=1 // loop_header_branch
      %26 = sbr.rel (%p24) target = $region8
    $region5: #{tpu_custom_call.1} parent=1 // loop_body
      %s28 = ssub.s32 %s23, 1
      %s29 = ssub.s32 %s23, 2
      %s30 = sadd.s32 %s23, 1
      %s31 = ssub.s32 %s23, %s30
      %p32 = scmp.eq.s32.totalorder %s31, 0
      %s34 = sadd.s32 %s33, 1
      %s35 = scalar_select %p32, %s33, %s34
      %p38 = pneg %p32
      %p39 = scmp.eq.s32.totalorder %s23, 1
      %p40 = por %p38, %p39
      %p41 = scmp.ne.s32.totalorder %s33, %s36
      %p42 = scmp.eq.s32.totalorder %s23, 0
      %p43 = por %p41, %p42
      %p44 = scmp.ne.s32.totalorder %s33, %s36
      %p45 = scmp.eq.s32.totalorder %s28, 1
      %p46 = por %p44, %p45
      %p47 = scmp.ne.s32.totalorder %s36, %s37
      %p48 = scmp.eq.s32.totalorder %s28, 0
      %p49 = por %p47, %p48
      %p50 = scmp.ne.s32.totalorder %s36, %s37
      %p51 = scmp.eq.s32.totalorder %s29, 1
      %p52 = por %p50, %p51
      %p54 = scmp.ne.s32.totalorder %s37, %s53
      %p55 = scmp.eq.s32.totalorder %s29, 0
      %p56 = por %p54, %p55
      %s57 = ssub.s32 %s23, %s30
      %p58 = scmp.eq.s32.totalorder %s57, 0
      %s60 = sadd.s32 %s59, 1
      %s61 = scalar_select %p58, %s59, %s60
      %p64 = pneg %p58
      %p65 = scmp.eq.s32.totalorder %s23, 1
      %p66 = por %p64, %p65
      %p67 = scmp.ne.s32.totalorder %s59, %s62
      %p68 = scmp.eq.s32.totalorder %s23, 0
      %p69 = por %p67, %p68
      %p70 = scmp.ne.s32.totalorder %s59, %s62
      %p71 = scmp.eq.s32.totalorder %s28, 1
      %p72 = por %p70, %p71
      %p73 = scmp.ne.s32.totalorder %s62, %s63
      %p74 = scmp.eq.s32.totalorder %s28, 0
      %p75 = por %p73, %p74
      %p76 = scmp.ne.s32.totalorder %s62, %s63
      %p77 = scmp.eq.s32.totalorder %s29, 1
      %p78 = por %p76, %p77
      %p80 = scmp.ne.s32.totalorder %s63, %s79
      %p81 = scmp.eq.s32.totalorder %s29, 0
      %p82 = por %p80, %p81
      %s84 = sadd.s32 %s83, 1
      %p87 = scmp.eq.s32.totalorder %s23, 1
      %p88 = scmp.ne.s32.totalorder %s83, %s85
      %p89 = scmp.eq.s32.totalorder %s23, 0
      %p90 = por %p88, %p89
      %p91 = scmp.ne.s32.totalorder %s83, %s85
      %p92 = scmp.eq.s32.totalorder %s28, 1
      %p93 = por %p91, %p92
      %p94 = scmp.ne.s32.totalorder %s85, %s86
      %p95 = scmp.eq.s32.totalorder %s28, 0
      %p96 = por %p94, %p95
      %p97 = scmp.ne.s32.totalorder %s85, %s86
      %p98 = scmp.eq.s32.totalorder %s29, 1
      %p99 = por %p97, %p98
      %p101 = scmp.ne.s32.totalorder %s86, %s100
      %p102 = scmp.eq.s32.totalorder %s29, 0
      %p103 = por %p101, %p102
      %s105 = sadd.s32 %s104, 1
      %p108 = scmp.eq.s32.totalorder %s23, 1
      %p109 = scmp.ne.s32.totalorder %s104, %s106
      %p110 = scmp.eq.s32.totalorder %s23, 0
      %p111 = por %p109, %p110
      %p112 = scmp.ne.s32.totalorder %s104, %s106
      %p113 = scmp.eq.s32.totalorder %s28, 1
      %p114 = por %p112, %p113
      %p115 = scmp.ne.s32.totalorder %s106, %s107
      %p116 = scmp.eq.s32.totalorder %s28, 0
      %p117 = por %p115, %p116
      %p118 = scmp.ne.s32.totalorder %s106, %s107
      %p119 = scmp.eq.s32.totalorder %s29, 1
      %p120 = por %p118, %p119
      %p122 = scmp.ne.s32.totalorder %s107, %s121
      %p123 = scmp.eq.s32.totalorder %s29, 0
      %p124 = por %p122, %p123
      %s126 = sadd.s32 %s125, 1
      %p129 = scmp.eq.s32.totalorder %s23, 1
      %p130 = scmp.ne.s32.totalorder %s125, %s127
      %p131 = scmp.eq.s32.totalorder %s23, 0
      %p132 = por %p130, %p131
      %p133 = scmp.ne.s32.totalorder %s125, %s127
      %p134 = scmp.eq.s32.totalorder %s28, 1
      %p135 = por %p133, %p134
      %p136 = scmp.ne.s32.totalorder %s127, %s128
      %p137 = scmp.eq.s32.totalorder %s28, 0
      %p138 = por %p136, %p137
      %p139 = scmp.ne.s32.totalorder %s127, %s128
      %p140 = scmp.eq.s32.totalorder %s29, 1
      %p141 = por %p139, %p140
      %p143 = scmp.ne.s32.totalorder %s128, %s142
      %p144 = scmp.eq.s32.totalorder %s29, 0
      %p145 = por %p143, %p144
      %s147 = sadd.s32 %s146, 1
      %p150 = scmp.eq.s32.totalorder %s23, 1
      %p151 = scmp.ne.s32.totalorder %s146, %s148
      %p152 = scmp.eq.s32.totalorder %s23, 0
      %p153 = por %p151, %p152
      %p154 = scmp.ne.s32.totalorder %s146, %s148
      %p155 = scmp.eq.s32.totalorder %s28, 1
      %p156 = por %p154, %p155
      %p157 = scmp.ne.s32.totalorder %s148, %s149
      %p158 = scmp.eq.s32.totalorder %s28, 0
      %p159 = por %p157, %p158
      %p160 = scmp.ne.s32.totalorder %s148, %s149
      %p161 = scmp.eq.s32.totalorder %s29, 1
      %p162 = por %p160, %p161
      %p164 = scmp.ne.s32.totalorder %s149, %s163
      %p165 = scmp.eq.s32.totalorder %s29, 0
      %p166 = por %p164, %p165
      %s168 = sadd.s32 %s167, 1
      %p171 = scmp.eq.s32.totalorder %s23, 1
      %p172 = scmp.ne.s32.totalorder %s167, %s169
      %p173 = scmp.eq.s32.totalorder %s23, 0
      %p174 = por %p172, %p173
      %p175 = scmp.ne.s32.totalorder %s167, %s169
      %p176 = scmp.eq.s32.totalorder %s28, 1
      %p177 = por %p175, %p176
      %p178 = scmp.ne.s32.totalorder %s169, %s170
      %p179 = scmp.eq.s32.totalorder %s28, 0
      %p180 = por %p178, %p179
      %p181 = scmp.ne.s32.totalorder %s169, %s170
      %p182 = scmp.eq.s32.totalorder %s29, 1
      %p183 = por %p181, %p182
      %p185 = scmp.ne.s32.totalorder %s170, %s184
      %p186 = scmp.eq.s32.totalorder %s29, 0
      %p187 = por %p185, %p186
      %s188 = ssub.s32 %s23, %s30
      %p189 = scmp.eq.s32.totalorder %s188, 0
      %s191 = sadd.s32 %s190, 1
      %s192 = scalar_select %p189, %s190, %s191
      %p195 = pneg %p189
      %p196 = scmp.eq.s32.totalorder %s23, 1
      %p197 = por %p195, %p196
      %p198 = scmp.ne.s32.totalorder %s190, %s193
      %p199 = scmp.eq.s32.totalorder %s23, 0
      %p200 = por %p198, %p199
      %p201 = scmp.ne.s32.totalorder %s190, %s193
      %p202 = scmp.eq.s32.totalorder %s28, 1
      %p203 = por %p201, %p202
      %p204 = scmp.ne.s32.totalorder %s193, %s194
      %p205 = scmp.eq.s32.totalorder %s28, 0
      %p206 = por %p204, %p205
      %p207 = scmp.ne.s32.totalorder %s193, %s194
      %p208 = scmp.eq.s32.totalorder %s29, 1
      %p209 = por %p207, %p208
      %p211 = scmp.ne.s32.totalorder %s194, %s210
      %p212 = scmp.eq.s32.totalorder %s29, 0
      %p213 = por %p211, %p212
      %p214 = scmp.le.s32.totalorder 1, %s23
      %p215 = scmp.lt.s32.totalorder %s23, 3
      %p216 = pnand %p214, %p215
      %p217 = pneg %p216
      // Predicated region
      $region9: #{tpu_custom_call.1} parent=5 // pred_check
        _
      $region10: #{tpu_custom_call.1} parent=5 // pred_check_branch
        %219 = sbr.rel (%p216) target = $region12
      $region11: #{tpu_custom_call.1} parent=5 // pred_region
        %s220 = ssub.s32 %s23, 1
        // Predicated region
        $region13: #{tpu_custom_call.1} parent=11 // pred_check
          %p221 = pneg %p96
        $region14: #{tpu_custom_call.1} parent=11 // pred_check_branch
          %223 = sbr.rel (%p221) target = $region16
        $region15: #{tpu_custom_call.1} parent=11 // pred_region
          %s225 = ssub.s32 2048, 2048
          %226 = vsyncadd [#allocation6], %s225
          %s227 = sshll.u32 [#allocation7], 4
          %s228 = int_to_ptr.vmem [resolvable:$true] %s227
          %233 = dma.hbm_to_vmem [thread:$0]  %s2, 2048, %s228, [#allocation6], 128, 128, 8
        $region16: #{tpu_custom_call.1} parent=11 // pred_fallthru
          _
        // Predicated region
        $region17: #{tpu_custom_call.1} parent=11 // pred_check
          %p234 = pneg %p117
        $region18: #{tpu_custom_call.1} parent=11 // pred_check_branch
          %236 = sbr.rel (%p234) target = $region20
        $region19: #{tpu_custom_call.1} parent=11 // pred_region
          %s238 = ssub.s32 2048, 2048
          %239 = vsyncadd [#allocation9], %s238
          %s240 = sshll.u32 [#allocation8], 4
          %s241 = int_to_ptr.vmem [resolvable:$true] %s240
          %246 = dma.hbm_to_vmem [thread:$0]  %s3, 2048, %s241, [#allocation9], 128, 128, 8
        $region20: #{tpu_custom_call.1} parent=11 // pred_fallthru
          _
        // Predicated region
        $region21: #{tpu_custom_call.1} parent=11 // pred_check
          %p247 = pneg %p138
        $region22: #{tpu_custom_call.1} parent=11 // pred_check_branch
          %249 = sbr.rel (%p247) target = $region24
        $region23: #{tpu_custom_call.1} parent=11 // pred_region
          _
        $region24: #{tpu_custom_call.1} parent=11 // pred_fallthru
          _
        // Predicated region
        $region25: #{tpu_custom_call.1} parent=11 // pred_check
          %p250 = pneg %p159
        $region26: #{tpu_custom_call.1} parent=11 // pred_check_branch
          %252 = sbr.rel (%p250) target = $region28
        $region27: #{tpu_custom_call.1} parent=11 // pred_region
          %s254 = ssub.s32 2048, 2048
          %255 = vsyncadd [#allocation9], %s254
          %s256 = sshll.u32 [#allocation10], 4
          %s257 = int_to_ptr.vmem [resolvable:$true] %s256
          %262 = dma.hbm_to_vmem [thread:$0]  %s5, 2048, %s257, [#allocation9], 128, 128, 8
        $region28: #{tpu_custom_call.1} parent=11 // pred_fallthru
          _
        // Predicated region
        $region29: #{tpu_custom_call.1} parent=11 // pred_check
          %p263 = pneg %p180
        $region30: #{tpu_custom_call.1} parent=11 // pred_check_branch
          %265 = sbr.rel (%p263) target = $region32
        $region31: #{tpu_custom_call.1} parent=11 // pred_region
          _
        $region32: #{tpu_custom_call.1} parent=11 // pred_fallthru
          _
      $region12: #{tpu_custom_call.1} parent=5 // pred_fallthru
        _
      %p266 = scmp.lt.s32.totalorder %s23, 2
      // Predicated region
      $region33: #{tpu_custom_call.1} parent=5 // pred_check
        %p267 = pneg %p266
      $region34: #{tpu_custom_call.1} parent=5 // pred_check_branch
        %269 = sbr.rel (%p267) target = $region36
      $region35: #{tpu_custom_call.1} parent=5 // pred_region
        // Predicated region
        $region37: #{tpu_custom_call.1} parent=35 // pred_check
          %p270 = pneg %p43
        $region38: #{tpu_custom_call.1} parent=35 // pred_check_branch
          %272 = sbr.rel (%p270) target = $region40
        $region39: #{tpu_custom_call.1} parent=35 // pred_region
          %s273 = sand.u32 %s33, 1
          %s274 = scalar_lea.sflag [#allocation3], %s273
          %s275 = sand.u32 %s33, 1
          %s276 = smul.addr %s275, 16
          %s277 = scalar_lea.vmem [#allocation2], %s276
          %s278 = smul.u32 2, %s23
          %s279 = ssub.s32 3, %s278
          %p280 = scmp.lt.s32.totalorder %s279, 2
          %s281 = scalar_select %p280, %s279, 2
          %s282 = smul.u32 128, %s281
          %s284 = ssub.s32 256, %s282
          %285 = vsyncadd %s274, %s284
          %p286 = scmp.ne.s32.totalorder 0, %s282
          %s287 = smul.addr %s278, 128
          %s288 = scalar_lea.hbm %s0, %s287
          %s289 = smul.u32 8, %s281
          %s290 = sshll.u32 %s277, 4
          %s291 = int_to_ptr.vmem [resolvable:$true] %s290
          %s292 = sshll.u32 %s289, 4
          %296 = dma.hbm_to_vmem [thread:$0]  (%p286), %s288, %s292, %s291, %s274, 128, 128, 8
        $region40: #{tpu_custom_call.1} parent=35 // pred_fallthru
          _
        // Predicated region
        $region41: #{tpu_custom_call.1} parent=35 // pred_check
          %p297 = pneg %p69
        $region42: #{tpu_custom_call.1} parent=35 // pred_check_branch
          %299 = sbr.rel (%p297) target = $region44
        $region43: #{tpu_custom_call.1} parent=35 // pred_region
          %s300 = sand.u32 %s23, 1
          %s301 = scalar_lea.sflag [#allocation6], %s300
          %s302 = sand.u32 %s59, 1
          %s303 = smul.addr %s302, 16
          %s304 = scalar_lea.vmem [#allocation5], %s303
          %s305 = smul.u32 2, %s23
          %s306 = ssub.s32 3, %s305
          %p307 = scmp.lt.s32.totalorder %s306, 2
          %s308 = scalar_select %p307, %s306, 2
          %s309 = smul.u32 128, %s308
          %s311 = ssub.s32 256, %s309
          %312 = vsyncadd %s301, %s311
          %p313 = scmp.ne.s32.totalorder 0, %s309
          %s314 = smul.addr %s305, 128
          %s315 = scalar_lea.hbm %s1, %s314
          %s316 = smul.u32 8, %s308
          %s317 = sshll.u32 %s304, 4
          %s318 = int_to_ptr.vmem [resolvable:$true] %s317
          %s319 = sshll.u32 %s316, 4
          %323 = dma.hbm_to_vmem [thread:$0]  (%p313), %s315, %s319, %s318, %s301, 128, 128, 8
        $region44: #{tpu_custom_call.1} parent=35 // pred_fallthru
          _
      $region36: #{tpu_custom_call.1} parent=5 // pred_fallthru
        _
      %p324 = scmp.le.s32.totalorder 1, %s23
      %p325 = scmp.lt.s32.totalorder %s23, 3
      %p326 = pnand %p324, %p325
      %p327 = pneg %p326
      // Predicated region
      $region45: #{tpu_custom_call.1} parent=5 // pred_check
        _
      $region46: #{tpu_custom_call.1} parent=5 // pred_check_branch
        %329 = sbr.rel (%p326) target = $region48
      $region47: #{tpu_custom_call.1} parent=5 // pred_region
        %s330 = ssub.s32 %s23, 1
        %s331 = sand.u32 %s36, 1
        %s332 = scalar_lea.sflag [#allocation3], %s331
        %s333 = sand.u32 %s36, 1
        %s334 = smul.addr %s333, 16
        %s335 = scalar_lea.vmem [#allocation2], %s334
        // Predicated region
        $region49: #{tpu_custom_call.1} parent=47 // pred_check
          %p336 = pneg %p49
        $region50: #{tpu_custom_call.1} parent=47 // pred_check_branch
          %338 = sbr.rel (%p336) target = $region52
        $region51: #{tpu_custom_call.1} parent=47 // pred_region
          %339 = dma.done %s332, 256
        $region52: #{tpu_custom_call.1} parent=47 // pred_fallthru
          _
        %s340 = sand.u32 %s28, 1
        %s341 = scalar_lea.sflag [#allocation6], %s340
        %s342 = sand.u32 %s62, 1
        %s343 = smul.addr %s342, 16
        %s344 = scalar_lea.vmem [#allocation5], %s343
        // Predicated region
        $region53: #{tpu_custom_call.1} parent=47 // pred_check
          %p345 = pneg %p75
        $region54: #{tpu_custom_call.1} parent=47 // pred_check_branch
          %347 = sbr.rel (%p345) target = $region56
        $region55: #{tpu_custom_call.1} parent=47 // pred_region
          %348 = dma.done %s341, 256
        $region56: #{tpu_custom_call.1} parent=47 // pred_fallthru
          _
        // Predicated region
        $region57: #{tpu_custom_call.1} parent=47 // pred_check
          %p349 = pneg %p96
        $region58: #{tpu_custom_call.1} parent=47 // pred_check_branch
          %351 = sbr.rel (%p349) target = $region60
        $region59: #{tpu_custom_call.1} parent=47 // pred_region
          %352 = dma.done [#allocation6], 2048
        $region60: #{tpu_custom_call.1} parent=47 // pred_fallthru
          _
        // Predicated region
        $region61: #{tpu_custom_call.1} parent=47 // pred_check
          %p353 = pneg %p117
        $region62: #{tpu_custom_call.1} parent=47 // pred_check_branch
          %355 = sbr.rel (%p353) target = $region64
        $region63: #{tpu_custom_call.1} parent=47 // pred_region
          %356 = dma.done [#allocation9], 2048
        $region64: #{tpu_custom_call.1} parent=47 // pred_fallthru
          _
        // Predicated region
        $region65: #{tpu_custom_call.1} parent=47 // pred_check
          %p357 = pneg %p159
        $region66: #{tpu_custom_call.1} parent=47 // pred_check_branch
          %359 = sbr.rel (%p357) target = $region68
        $region67: #{tpu_custom_call.1} parent=47 // pred_region
          %360 = dma.done [#allocation9], 2048
        $region68: #{tpu_custom_call.1} parent=47 // pred_fallthru
          _
        %s361 = sand.u32 %s36, 1
        %s362 = scalar_lea.sflag [#allocation3], %s361
        %s363 = sand.u32 %s36, 1
        %s364 = smul.addr %s363, 16
        %s365 = scalar_lea.vmem [#allocation2], %s364
        %p366 = pneg %p49
        %p367 = pneg %p46
        %s368 = sand.u32 %s28, 1
        %s369 = scalar_lea.sflag [#allocation6], %s368
        %s370 = sand.u32 %s62, 1
        %s371 = smul.addr %s370, 16
        %s372 = scalar_lea.vmem [#allocation5], %s371
        %p373 = pneg %p75
        %p374 = pneg %p72
        %p375 = pneg %p96
        %p376 = pneg %p93
        %p377 = pneg %p117
        %p378 = pneg %p114
        %p379 = pneg %p138
        %p380 = pneg %p135
        %p381 = pneg %p159
        %p382 = pneg %p156
        %p383 = pneg %p180
        %p384 = pneg %p177
        %p385 = pneg %p206
        %p386 = pneg %p203
        %s387 = sand.u32 %s193, 1
        %s388 = scalar_lea.sflag [#allocation4], %s387
        %s389 = sand.u32 %s193, 1
        %s390 = smul.addr %s389, 16
        %s391 = scalar_lea.vmem [#allocation11], %s390
        %s392 = smul.u32 2, %s28
        %s393 = ssub.s32 3, %s392
        %p394 = scmp.lt.s32.totalorder %s393, 2
        %s395 = scalar_select %p394, %s393, 2
        %s396 = smul.u32 128, %s395
        %s397 = smul.u32 2, %s28
        %s398 = ssub.s32 3, %s397
        %p399 = scmp.lt.s32.totalorder %s398, 2
        %s400 = scalar_select %p399, %s398, 2
        %s401 = smul.u32 128, %s400
        %s402 = smul.u32 2, %s28
        %s403 = ssub.s32 3, %s402
        %p404 = scmp.lt.s32.totalorder %s403, 2
        %s405 = scalar_select %p404, %s403, 2
        %s406 = smul.u32 128, %s405
        %v407 = vld [vmem:[%s335] sm:$0xff]
        %v408 = vld [vmem:[%s335 + $0x8] sm:$0xff]
        %v409 = vld [vmem:[#allocation7] sm:$0xff]
        %v410 = vld [vmem:[#allocation7 + $0x8] sm:$0xff]
        %v411 = vld [vmem:[#allocation7 + $0x10] sm:$0xff]
        %v412 = vld [vmem:[#allocation7 + $0x18] sm:$0xff]
        %v413 = vld [vmem:[#allocation7 + $0x20] sm:$0xff]
        %v414 = vld [vmem:[#allocation7 + $0x28] sm:$0xff]
        %v415 = vld [vmem:[#allocation7 + $0x30] sm:$0xff]
        %v416 = vld [vmem:[#allocation7 + $0x38] sm:$0xff]
        %v417 = vld [vmem:[#allocation7 + $0x40] sm:$0xff]
        %v418 = vld [vmem:[#allocation7 + $0x48] sm:$0xff]
        %v419 = vld [vmem:[#allocation7 + $0x50] sm:$0xff]
        %v420 = vld [vmem:[#allocation7 + $0x58] sm:$0xff]
        %v421 = vld [vmem:[#allocation7 + $0x60] sm:$0xff]
        %v422 = vld [vmem:[#allocation7 + $0x68] sm:$0xff]
        %v423 = vld [vmem:[#allocation7 + $0x70] sm:$0xff]
        %v424 = vld [vmem:[#allocation7 + $0x78] sm:$0xff]
        %v425 = vld [vmem:[%s344] sm:$0xff]
        %v426 = vld [vmem:[%s344 + $0x8] sm:$0xff]
        %v427 = vld [vmem:[#allocation8] sm:$0xff]
        %v428 = vld [vmem:[#allocation8 + $0x8] sm:$0xff]
        %v429 = vld [vmem:[#allocation8 + $0x10] sm:$0xff]
        %v430 = vld [vmem:[#allocation8 + $0x18] sm:$0xff]
        %v431 = vld [vmem:[#allocation8 + $0x20] sm:$0xff]
        %v432 = vld [vmem:[#allocation8 + $0x28] sm:$0xff]
        %v433 = vld [vmem:[#allocation8 + $0x30] sm:$0xff]
        %v434 = vld [vmem:[#allocation8 + $0x38] sm:$0xff]
        %v435 = vld [vmem:[#allocation8 + $0x40] sm:$0xff]
        %v436 = vld [vmem:[#allocation8 + $0x48] sm:$0xff]
        %v437 = vld [vmem:[#allocation8 + $0x50] sm:$0xff]
        %v438 = vld [vmem:[#allocation8 + $0x58] sm:$0xff]
        %v439 = vld [vmem:[#allocation8 + $0x60] sm:$0xff]
        %v440 = vld [vmem:[#allocation8 + $0x68] sm:$0xff]
        %v441 = vld [vmem:[#allocation8 + $0x70] sm:$0xff]
        %v442 = vld [vmem:[#allocation8 + $0x78] sm:$0xff]
        %443 = vmatprep.subr.mxu0 0.0
        %444 = vmatpush1.msra.mxu0 %v442
        %445 = vmatprep.subr.mxu0 0.0
        %446 = vmatpush1.msra.mxu0 %v441
        %447 = vmatprep.subr.mxu0 0.0
        %448 = vmatpush1.msra.mxu0 %v440
        %449 = vmatprep.subr.mxu0 0.0
        %450 = vmatpush1.msra.mxu0 %v439
        %451 = vmatprep.subr.mxu0 0.0
        %452 = vmatpush1.msra.mxu0 %v438
        %453 = vmatprep.subr.mxu0 0.0
        %454 = vmatpush1.msra.mxu0 %v437
        %455 = vmatprep.subr.mxu0 0.0
        %456 = vmatpush1.msra.mxu0 %v436
        %457 = vmatprep.subr.mxu0 0.0
        %458 = vmatpush1.msra.mxu0 %v435
        %459 = vmatprep.subr.mxu0 0.0
        %460 = vmatpush1.msra.mxu0 %v434
        %461 = vmatprep.subr.mxu0 0.0
        %462 = vmatpush1.msra.mxu0 %v433
        %463 = vmatprep.subr.mxu0 0.0
        %464 = vmatpush1.msra.mxu0 %v432
        %465 = vmatprep.subr.mxu0 0.0
        %466 = vmatpush1.msra.mxu0 %v431
        %467 = vmatprep.subr.mxu0 0.0
        %468 = vmatpush1.msra.mxu0 %v430
        %469 = vmatprep.subr.mxu0 0.0
        %470 = vmatpush1.msra.mxu0 %v429
        %471 = vmatprep.subr.mxu0 0.0
        %472 = vmatpush1.msra.mxu0 %v428
        %473 = vmatprep.subr.mxu0 0.0
        %474 = vmatpush1.msra.mxu0 %v427
        %475 = vmatprep.subr.mxu0 0.0
        %476 = vmatpush2.msra.mxu0 0.0
        %477 = vmatprep.subr.mxu0 0.0
        %478 = vmatpush2.msra.mxu0 0.0
        %479 = vmatprep.subr.mxu0 0.0
        %480 = vmatpush2.msra.mxu0 0.0
        %481 = vmatprep.subr.mxu0 0.0
        %482 = vmatpush2.msra.mxu0 0.0
        %483 = vmatprep.subr.mxu0 0.0
        %484 = vmatpush2.msra.mxu0 0.0
        %485 = vmatprep.subr.mxu0 0.0
        %486 = vmatpush2.msra.mxu0 0.0
        %487 = vmatprep.subr.mxu0 0.0
        %488 = vmatpush2.msra.mxu0 0.0
        %489 = vmatprep.subr.mxu0 0.0
        %490 = vmatpush2.msra.mxu0 0.0
        %491 = vmatprep.subr.mxu0 0.0
        %492 = vmatpush2.msra.mxu0 0.0
        %493 = vmatprep.subr.mxu0 0.0
        %494 = vmatpush2.msra.mxu0 0.0
        %495 = vmatprep.subr.mxu0 0.0
        %496 = vmatpush2.msra.mxu0 0.0
        %497 = vmatprep.subr.mxu0 0.0
        %498 = vmatpush2.msra.mxu0 0.0
        %499 = vmatprep.subr.mxu0 0.0
        %500 = vmatpush2.msra.mxu0 0.0
        %501 = vmatprep.subr.mxu0 0.0
        %502 = vmatpush2.msra.mxu0 0.0
        %503 = vmatprep.subr.mxu0 0.0
        %504 = vmatpush2.msra.mxu0 0.0
        %505 = vmatprep.subr.mxu0 0.0
        %506 = vmatpush2.msra.mxu0 0.0
        %507 = vmatprep.mubr.f32.mxu0 0.0
        %508 = vmatmul.mubr.f32.gmra.mxu0 %v425
        %v509 = vpop.f32.mrf.mxu0
        %v510 = vadd.f32 0.0, %v509
        %v511 = vpop.f32.mrf.mxu0
        %512 = vmatprep.mubr.f32.mxu0 0.0
        %513 = vmatmul.mubr.f32.gmra.mxu0 %v426
        %v514 = vpop.f32.mrf.mxu0
        %v515 = vadd.f32 0.0, %v514
        %v516 = vpop.f32.mrf.mxu0
        %517 = vdwg.mxu0
        %518 = vmatprep.subr.mxu0 0.0
        %519 = vmatpush1.msra.mxu0 %v424
        %520 = vmatprep.subr.mxu0 0.0
        %521 = vmatpush1.msra.mxu0 %v423
        %522 = vmatprep.subr.mxu0 0.0
        %523 = vmatpush1.msra.mxu0 %v422
        %524 = vmatprep.subr.mxu0 0.0
        %525 = vmatpush1.msra.mxu0 %v421
        %526 = vmatprep.subr.mxu0 0.0
        %527 = vmatpush1.msra.mxu0 %v420
        %528 = vmatprep.subr.mxu0 0.0
        %529 = vmatpush1.msra.mxu0 %v419
        %530 = vmatprep.subr.mxu0 0.0
        %531 = vmatpush1.msra.mxu0 %v418
        %532 = vmatprep.subr.mxu0 0.0
        %533 = vmatpush1.msra.mxu0 %v417
        %534 = vmatprep.subr.mxu0 0.0
        %535 = vmatpush1.msra.mxu0 %v416
        %536 = vmatprep.subr.mxu0 0.0
        %537 = vmatpush1.msra.mxu0 %v415
        %538 = vmatprep.subr.mxu0 0.0
        %539 = vmatpush1.msra.mxu0 %v414
        %540 = vmatprep.subr.mxu0 0.0
        %541 = vmatpush1.msra.mxu0 %v413
        %542 = vmatprep.subr.mxu0 0.0
        %543 = vmatpush1.msra.mxu0 %v412
        %544 = vmatprep.subr.mxu0 0.0
        %545 = vmatpush1.msra.mxu0 %v411
        %546 = vmatprep.subr.mxu0 0.0
        %547 = vmatpush1.msra.mxu0 %v410
        %548 = vmatprep.subr.mxu0 0.0
        %549 = vmatpush1.msra.mxu0 %v409
        %550 = vmatprep.subr.mxu0 0.0
        %551 = vmatpush2.msra.mxu0 0.0
        %552 = vmatprep.subr.mxu0 0.0
        %553 = vmatpush2.msra.mxu0 0.0
        %554 = vmatprep.subr.mxu0 0.0
        %555 = vmatpush2.msra.mxu0 0.0
        %556 = vmatprep.subr.mxu0 0.0
        %557 = vmatpush2.msra.mxu0 0.0
        %558 = vmatprep.subr.mxu0 0.0
        %559 = vmatpush2.msra.mxu0 0.0
        %560 = vmatprep.subr.mxu0 0.0
        %561 = vmatpush2.msra.mxu0 0.0
        %562 = vmatprep.subr.mxu0 0.0
        %563 = vmatpush2.msra.mxu0 0.0
        %564 = vmatprep.subr.mxu0 0.0
        %565 = vmatpush2.msra.mxu0 0.0
        %566 = vmatprep.subr.mxu0 0.0
        %567 = vmatpush2.msra.mxu0 0.0
        %568 = vmatprep.subr.mxu0 0.0
        %569 = vmatpush2.msra.mxu0 0.0
        %570 = vmatprep.subr.mxu0 0.0
        %571 = vmatpush2.msra.mxu0 0.0
        %572 = vmatprep.subr.mxu0 0.0
        %573 = vmatpush2.msra.mxu0 0.0
        %574 = vmatprep.subr.mxu0 0.0
        %575 = vmatpush2.msra.mxu0 0.0
        %576 = vmatprep.subr.mxu0 0.0
        %577 = vmatpush2.msra.mxu0 0.0
        %578 = vmatprep.subr.mxu0 0.0
        %579 = vmatpush2.msra.mxu0 0.0
        %580 = vmatprep.subr.mxu0 0.0
        %581 = vmatpush2.msra.mxu0 0.0
        %582 = vmatprep.mubr.f32.mxu0 0.0
        %583 = vmatmul.mubr.f32.gmra.mxu0 %v407
        %v584 = vpop.f32.mrf.mxu0
        %v585 = vadd.f32 %v510, %v584
        %v586 = vpop.f32.mrf.mxu0
        %587 = vmatprep.mubr.f32.mxu0 0.0
        %588 = vmatmul.mubr.f32.gmra.mxu0 %v408
        %v589 = vpop.f32.mrf.mxu0
        %v590 = vadd.f32 %v515, %v589
        %v591 = vpop.f32.mrf.mxu0
        %592 = vdwg.mxu0
        %v593 = vld [vmem:[%s4] sm:$0x1]
        %v595 = vlaneseq
        %v596 = vshrl.u32 %v595, 7
        %v597 = vsub.s32 0, %v596
        %v598 = vrot.slane %v593, %v597
        %v600 = vadd.f32 %v585, %v598
        %v601 = vadd.f32 %v590, %v598
        %v602 = vmul.f32 %v600, 0.5
        %v603 = vmul.f32 %v601, 0.5
        %v604 = vmul.f32 %v600, 0.70710677
        %v605 = vmul.f32 %v601, 0.70710677
        %v606 = verf.f32.pop %v604
        %v607 = verf.f32.pop %v605
        %v608 = vadd.f32 %v606, 1.0
        %v609 = vadd.f32 %v607, 1.0
        %v610 = vmul.f32 %v602, %v608
        %v611 = vmul.f32 %v603, %v609
        %v612 = vld [vmem:[#allocation10] sm:$0xff]
        %v613 = vld [vmem:[#allocation10 + $0x8] sm:$0xff]
        %v614 = vld [vmem:[#allocation10 + $0x10] sm:$0xff]
        %v615 = vld [vmem:[#allocation10 + $0x18] sm:$0xff]
        %v616 = vld [vmem:[#allocation10 + $0x20] sm:$0xff]
        %v617 = vld [vmem:[#allocation10 + $0x28] sm:$0xff]
        %v618 = vld [vmem:[#allocation10 + $0x30] sm:$0xff]
        %v619 = vld [vmem:[#allocation10 + $0x38] sm:$0xff]
        %v620 = vld [vmem:[#allocation10 + $0x40] sm:$0xff]
        %v621 = vld [vmem:[#allocation10 + $0x48] sm:$0xff]
        %v622 = vld [vmem:[#allocation10 + $0x50] sm:$0xff]
        %v623 = vld [vmem:[#allocation10 + $0x58] sm:$0xff]
        %v624 = vld [vmem:[#allocation10 + $0x60] sm:$0xff]
        %v625 = vld [vmem:[#allocation10 + $0x68] sm:$0xff]
        %v626 = vld [vmem:[#allocation10 + $0x70] sm:$0xff]
        %v627 = vld [vmem:[#allocation10 + $0x78] sm:$0xff]
        %v628 = vld [vmem:[%s6] sm:$0x1]
        %v630 = vlaneseq
        %v631 = vshrl.u32 %v630, 7
        %v632 = vsub.s32 0, %v631
        %v633 = vrot.slane %v628, %v632
        %635 = vmatprep.subr.mxu0 0.0
        %636 = vmatpush1.msra.mxu0 %v627
        %637 = vmatprep.subr.mxu0 0.0
        %638 = vmatpush1.msra.mxu0 %v626
        %639 = vmatprep.subr.mxu0 0.0
        %640 = vmatpush1.msra.mxu0 %v625
        %641 = vmatprep.subr.mxu0 0.0
        %642 = vmatpush1.msra.mxu0 %v624
        %643 = vmatprep.subr.mxu0 0.0
        %644 = vmatpush1.msra.mxu0 %v623
        %645 = vmatprep.subr.mxu0 0.0
        %646 = vmatpush1.msra.mxu0 %v622
        %647 = vmatprep.subr.mxu0 0.0
        %648 = vmatpush1.msra.mxu0 %v621
        %649 = vmatprep.subr.mxu0 0.0
        %650 = vmatpush1.msra.mxu0 %v620
        %651 = vmatprep.subr.mxu0 0.0
        %652 = vmatpush1.msra.mxu0 %v619
        %653 = vmatprep.subr.mxu0 0.0
        %654 = vmatpush1.msra.mxu0 %v618
        %655 = vmatprep.subr.mxu0 0.0
        %656 = vmatpush1.msra.mxu0 %v617
        %657 = vmatprep.subr.mxu0 0.0
        %658 = vmatpush1.msra.mxu0 %v616
        %659 = vmatprep.subr.mxu0 0.0
        %660 = vmatpush1.msra.mxu0 %v615
        %661 = vmatprep.subr.mxu0 0.0
        %662 = vmatpush1.msra.mxu0 %v614
        %663 = vmatprep.subr.mxu0 0.0
        %664 = vmatpush1.msra.mxu0 %v613
        %665 = vmatprep.subr.mxu0 0.0
        %666 = vmatpush1.msra.mxu0 %v612
        %667 = vmatprep.subr.mxu0 0.0
        %668 = vmatpush2.msra.mxu0 0.0
        %669 = vmatprep.subr.mxu0 0.0
        %670 = vmatpush2.msra.mxu0 0.0
        %671 = vmatprep.subr.mxu0 0.0
        %672 = vmatpush2.msra.mxu0 0.0
        %673 = vmatprep.subr.mxu0 0.0
        %674 = vmatpush2.msra.mxu0 0.0
        %675 = vmatprep.subr.mxu0 0.0
        %676 = vmatpush2.msra.mxu0 0.0
        %677 = vmatprep.subr.mxu0 0.0
        %678 = vmatpush2.msra.mxu0 0.0
        %679 = vmatprep.subr.mxu0 0.0
        %680 = vmatpush2.msra.mxu0 0.0
        %681 = vmatprep.subr.mxu0 0.0
        %682 = vmatpush2.msra.mxu0 0.0
        %683 = vmatprep.subr.mxu0 0.0
        %684 = vmatpush2.msra.mxu0 0.0
        %685 = vmatprep.subr.mxu0 0.0
        %686 = vmatpush2.msra.mxu0 0.0
        %687 = vmatprep.subr.mxu0 0.0
        %688 = vmatpush2.msra.mxu0 0.0
        %689 = vmatprep.subr.mxu0 0.0
        %690 = vmatpush2.msra.mxu0 0.0
        %691 = vmatprep.subr.mxu0 0.0
        %692 = vmatpush2.msra.mxu0 0.0
        %693 = vmatprep.subr.mxu0 0.0
        %694 = vmatpush2.msra.mxu0 0.0
        %695 = vmatprep.subr.mxu0 0.0
        %696 = vmatpush2.msra.mxu0 0.0
        %697 = vmatprep.subr.mxu0 0.0
        %698 = vmatpush2.msra.mxu0 0.0
        %699 = vmatprep.mubr.f32.mxu0 0.0
        %700 = vmatmul.mubr.f32.gmra.mxu0 %v610
        %v701 = vpop.f32.mrf.mxu0
        %v702 = vadd.f32 %v633, %v701
        %v703 = vpop.f32.mrf.mxu0
        %704 = vmatprep.mubr.f32.mxu0 0.0
        %705 = vmatmul.mubr.f32.gmra.mxu0 %v611
        %v706 = vpop.f32.mrf.mxu0
        %v707 = vadd.f32 %v633, %v706
        %v708 = vpop.f32.mrf.mxu0
        %709 = vdwg.mxu0
        %710 = vst [vmem:[%s391] sm:$0xff] %v702
        %711 = vst [vmem:[%s391 + $0x8] sm:$0xff] %v707
        %s712 = sand.u32 %s193, 1
        %s713 = scalar_lea.sflag [#allocation4], %s712
        %s714 = sand.u32 %s193, 1
        %s715 = smul.addr %s714, 16
        %s716 = scalar_lea.vmem [#allocation11], %s715
        // Predicated region
        $region69: #{tpu_custom_call.1} parent=47 // pred_check
          %p717 = pneg %p203
        $region70: #{tpu_custom_call.1} parent=47 // pred_check_branch
          %719 = sbr.rel (%p717) target = $region72
        $region71: #{tpu_custom_call.1} parent=47 // pred_region
          %s720 = smul.u32 2, %s28
          %s721 = ssub.s32 3, %s720
          %p722 = scmp.lt.s32.totalorder %s721, 2
          %s723 = scalar_select %p722, %s721, 2
          %s724 = smul.u32 128, %s723
          %s726 = ssub.s32 256, %s724
          %727 = vsyncadd %s713, %s726
          %p728 = scmp.ne.s32.totalorder 0, %s724
          %s729 = smul.addr %s720, 128
          %s730 = scalar_lea.hbm %s7, %s729
          %s731 = smul.u32 8, %s723
          %s732 = sshll.u32 %s716, 4
          %s733 = int_to_ptr.vmem [resolvable:$true] %s732
          %s734 = sshll.u32 %s731, 4
          %738 = dma.vmem_to_hbm [thread:$0]  (%p728), %s733, %s734, %s730, %s713, 128, 128, 8
        $region72: #{tpu_custom_call.1} parent=47 // pred_fallthru
          _
      $region48: #{tpu_custom_call.1} parent=5 // pred_fallthru
        _
      %p739 = scmp.le.s32.totalorder 2, %s23
      // Predicated region
      $region73: #{tpu_custom_call.1} parent=5 // pred_check
        %p740 = pneg %p739
      $region74: #{tpu_custom_call.1} parent=5 // pred_check_branch
        %742 = sbr.rel (%p740) target = $region76
      $region75: #{tpu_custom_call.1} parent=5 // pred_region
        %s743 = ssub.s32 %s23, 2
        // Predicated region
        $region77: #{tpu_custom_call.1} parent=75 // pred_check
          %p744 = pneg %p209
        $region78: #{tpu_custom_call.1} parent=75 // pred_check_branch
          %746 = sbr.rel (%p744) target = $region80
        $region79: #{tpu_custom_call.1} parent=75 // pred_region
          %s747 = sand.u32 %s194, 1
          %s748 = scalar_lea.sflag [#allocation4], %s747
          %s749 = sand.u32 %s194, 1
          %s750 = smul.addr %s749, 16
          %s751 = scalar_lea.vmem [#allocation11], %s750
          %752 = dma.done %s748, 256
        $region80: #{tpu_custom_call.1} parent=75 // pred_fallthru
          _
      $region76: #{tpu_custom_call.1} parent=5 // pred_fallthru
        _
    $region6: #{tpu_custom_call.1} parent=1 // loop_footer
      %s27 = sadd.s32 1, %s23
    $region7: #{tpu_custom_call.1} parent=1 // loop_footer_branch
      %22 = sbr.rel target = $region3
    $region8: #{tpu_custom_call.1} parent=1 // loop_exit
      _
    %753 = vsyncpa [#allocation3], 1
    %s754 = scalar_lea.sflag [#allocation3], 1
    %755 = vsyncpa %s754, 1
    %756 = vsyncpa [#allocation6], 1
    %s757 = scalar_lea.sflag [#allocation6], 1
    %758 = vsyncpa %s757, 1
    %759 = vsyncpa [#allocation9], 1
    %760 = vsyncpa [#allocation4], 1
    %s761 = scalar_lea.sflag [#allocation4], 1
    %762 = vsyncpa %s761, 1

</llo_original>
